<compile_context>
chip_gen: v7x
topology: tpu7x:2x2x1
jax: 0.10.0
libtpu: 0.0.40
codegen_flags: <defaults>
</compile_context>

<pallas_src>
import functools

import jax
import jax.numpy as jnp
from jax import lax
from jax.experimental import pallas as pl
from jax.experimental.pallas import tpu as pltpu

ALPHA, BETA, GAMMA = 1.0, 0.5, 0.1
_VMEM_LIMIT = 48 * 1024 * 1024  # safe on v5e/v6e (128 MiB) and v7x (64 MiB)


# -----------------------------------------------------------------------------
# Glue helpers: static tile-size selection.
# -----------------------------------------------------------------------------
def _pick_lane_width(numel, last):
    """Largest of {1024,512,256,128} dividing numel (lane-dense), else `last`."""
    for lw in (1024, 512, 256, 128):
        if numel % lw == 0:
            return lw
    return last


def _pick_row_tile(rows, cap=512):
    """Largest divisor of rows <= cap that is a multiple of 8 (or == rows)."""
    for t in range(min(rows, cap), 0, -1):
        if rows % t == 0 and (t % 8 == 0 or t == rows):
            return t
    return rows


def _pick_n_tile(n, cap=2048):
    """Largest multiple-of-128 divisor of n that is <= cap, else n (full)."""
    t = cap
    while t >= 128:
        if n % t == 0:
            return t
        t -= 128
    return n


# -----------------------------------------------------------------------------
# Kernel 1: tiled sum-of-squared-error + sum-of-absolute-error reduction.
# Per-tile partials -> "parallel" grid axis; summed in glue.
# -----------------------------------------------------------------------------
def _mse_l1_kernel(p_ref, t_ref, sse_ref, sad_ref):
    diff = p_ref[...].astype(jnp.float32) - t_ref[...].astype(jnp.float32)
    sse_ref[...] = jnp.sum(diff * diff).reshape(1, 1, 1)
    sad_ref[...] = jnp.sum(jnp.abs(diff)).reshape(1, 1, 1)


def mse_and_l1(y_pred, y_true):
    """Returns (mean squared error, mean absolute error) over all elements."""
    numel = y_pred.size
    lw = _pick_lane_width(numel, y_pred.shape[-1])
    rows = numel // lw
    p2d = y_pred.reshape(rows, lw)
    t2d = y_true.reshape(rows, lw)

    tr = _pick_row_tile(rows)
    nt = rows // tr

    sse, sad = pl.pallas_call(
        _mse_l1_kernel,
        grid=(nt,),
        in_specs=[
            pl.BlockSpec((tr, lw), lambda i: (i, 0)),
            pl.BlockSpec((tr, lw), lambda i: (i, 0)),
        ],
        out_specs=[
            pl.BlockSpec((1, 1, 1), lambda i: (i, 0, 0)),
            pl.BlockSpec((1, 1, 1), lambda i: (i, 0, 0)),
        ],
        out_shape=[
            jax.ShapeDtypeStruct((nt, 1, 1), jnp.float32),
            jax.ShapeDtypeStruct((nt, 1, 1), jnp.float32),
        ],
        compiler_params=pltpu.CompilerParams(
            dimension_semantics=("parallel",),
            vmem_limit_bytes=_VMEM_LIMIT),
    )(p2d, t2d)
    return jnp.sum(sse) / numel, jnp.sum(sad) / numel


# -----------------------------------------------------------------------------
# Kernel 2: per-scale style loss.
#   Stream (C, TN) feature tiles; accumulate Gram (C,C) in VMEM scratch via
#   dot_general contracting the last dims (no transpose relayout).
#   G_true is rank-1 constant: every entry equals sum(y^2)/N, so only a scalar
#   VPU reduction of the resized target is needed.
#   Finalize at the last N-tile: sum((Gram/N - sum(y^2)/N)^2) per batch.
# -----------------------------------------------------------------------------
def _style_kernel(f_ref, y_ref, out_ref, gram_acc, ysq_acc, *, inv_n):
    k = pl.program_id(1)

    @pl.when(k == 0)
    def _():
        gram_acc[...] = jnp.zeros_like(gram_acc)
        ysq_acc[...] = jnp.zeros_like(ysq_acc)

    f = f_ref[0]                              # (C, TN)
    y = y_ref[0].astype(jnp.float32)          # (1, TN)

    # Gram contraction on the last dims of both operands ('cn,dn->cd').
    gram_acc[...] += lax.dot_general(
        f, f,
        dimension_numbers=(((1,), (1,)), ((), ())),
        preferred_element_type=jnp.float32)
    ysq_acc[...] += jnp.sum(y * y, keepdims=True)

    @pl.when(k == pl.num_programs(1) - 1)
    def _():
        g = gram_acc[...] * inv_n                      # (C, C)
        s = ysq_acc[...] * inv_n                       # (1, 1) -> broadcast
        d = g - s
        out_ref[...] = jnp.sum(d * d).reshape(1, 1, 1)


def style_loss_for_scale(feat, y_true):
    """feat: (B, C, D, H, W); y_true: (B, 1, Dy, Hy, Wy). Returns scalar MSE of Grams."""
    B, C = feat.shape[:2]
    spatial = tuple(feat.shape[2:])
    N = spatial[0] * spatial[1] * spatial[2]

    # TODO(synk): trilinear resample (align_corners=False) left as JAX glue.
    y_resized = jax.image.resize(
        y_true, (y_true.shape[0], y_true.shape[1]) + spatial,
        method="trilinear", antialias=False)

    f3 = feat.reshape(B, C, N)           # keep native dtype; accumulate in f32
    y3 = y_resized.reshape(B, 1, N)

    tn = _pick_n_tile(N)
    kt = N // tn

    kernel = functools.partial(_style_kernel, inv_n=1.0 / N)

    partials = pl.pallas_call(
        kernel,
        grid=(B, kt),
        in_specs=[
            pl.BlockSpec((1, C, tn), lambda b, k: (b, 0, k)),
            pl.BlockSpec((1, 1, tn), lambda b, k: (b, 0, k)),
        ],
        out_specs=pl.BlockSpec((1, 1, 1), lambda b, k: (b, 0, 0)),
        out_shape=jax.ShapeDtypeStruct((B, 1, 1), jnp.float32),
        scratch_shapes=[
            pltpu.VMEM((C, C), jnp.float32),
            pltpu.VMEM((1, 1), jnp.float32),
        ],
        compiler_params=pltpu.CompilerParams(
            dimension_semantics=("parallel", "arbitrary"),
            vmem_limit_bytes=_VMEM_LIMIT),
    )(f3, y3)
    # nn.MSELoss averages over all B*C*C Gram entries.
    return jnp.sum(partials) / (B * C * C)


# -----------------------------------------------------------------------------
# Full MultiScaleLoss forward.
# -----------------------------------------------------------------------------
@jax.jit
def multi_scale_loss(y_pred, y_true, encoded_features):
    mse, contrast = mse_and_l1(y_pred, y_true)
    style = jnp.float32(0.0)
    for feat in encoded_features:
        style = style + style_loss_for_scale(feat, y_true)
    style = style / len(encoded_features)
    total = ALPHA * mse + BETA * contrast + GAMMA * style
    return total, mse, contrast, style


# -----------------------------------------------------------------------------
# Pure-JAX reference (sanity check; computes G_true the brute-force way).
# -----------------------------------------------------------------------------
def reference(y_pred, y_true, feats):
    mse = jnp.mean((y_pred - y_true) ** 2)
    contrast = jnp.mean(jnp.abs(y_pred - y_true))
    style = 0.0
    for f in feats:
        B, C = f.shape[:2]
        N = f.shape[2] * f.shape[3] * f.shape[4]
        yr = jax.image.resize(
            y_true, (y_true.shape[0], y_true.shape[1]) + tuple(f.shape[2:]),
            method="trilinear", antialias=False)
        ye = jnp.broadcast_to(yr, f.shape)
        fp = f.reshape(B, C, N)
        yp = ye.reshape(B, C, N)
        gp = jnp.einsum("bcn,bdn->bcd", fp, fp) / N
        gt = jnp.einsum("bcn,bdn->bcd", yp, yp) / N
        style += jnp.mean((gp - gt) ** 2)
    style /= len(feats)
    total = ALPHA * mse + BETA * contrast + GAMMA * style
    return total, mse, contrast, style


if __name__ == "__main__":
    key = jax.random.PRNGKey(0)
    k1, k2, k3, k4, k5 = jax.random.split(key, 5)

    # Small shapes consistent with a 3D UNet: single-channel volume prediction,
    # multi-scale encoder features (NCDHW).
    B, D, H, W = 2, 16, 16, 16
    y_pred = jax.random.normal(k1, (B, 1, D, H, W), dtype=jnp.float32)
    y_true = jax.random.normal(k2, (B, 1, D, H, W), dtype=jnp.float32)
    encoded_features = [
        jax.random.normal(k3, (B, 8, 16, 16, 16), dtype=jnp.float32),
        jax.random.normal(k4, (B, 16, 8, 8, 8), dtype=jnp.float32),
        jax.random.normal(k5, (B, 32, 4, 4, 4), dtype=jnp.float32),
    ]

    total, mse, contrast, style = multi_scale_loss(y_pred, y_true, encoded_features)
    jax.block_until_ready((total, mse, contrast, style))

    ref = reference(y_pred, y_true, encoded_features)
    for got, want in zip((total, mse, contrast, style), ref):
        assert jnp.allclose(got, want, rtol=1e-3, atol=1e-4), (got, want)

    print("KERNEL_OK")
</pallas_src>

<mosaic_0001>
module attributes {stable_mosaic.version = 11 : i64} {
  func.func @_style_kernel(%arg0: i32, %arg1: i32, %arg2: memref<1x16x512xf32, #tpu.memory_space<vmem>>, %arg3: memref<1x1x512xf32, #tpu.memory_space<vmem>>, %arg4: memref<1x1x1xf32, #tpu.memory_space<vmem>>, %arg5: memref<16x16xf32, #tpu.memory_space<vmem>>, %arg6: memref<1x1xf32, #tpu.memory_space<vmem>>) attributes {dimension_semantics = [#tpu.dimension_semantics<parallel>, #tpu.dimension_semantics<arbitrary>], iteration_bounds = array<i64: 2, 1>, scalar_prefetch = 0 : i64, scratch_operands = 2 : i64, tpu.core_type = #tpu.core_type<tc>, window_params = [{transform_indices = @transform_0, window_bounds = array<i64: 1, 16, 512>}, {transform_indices = @transform_1, window_bounds = array<i64: 1, 1, 512>}, {transform_indices = @transform_2, window_bounds = array<i64: 1, 1, 1>}]} {
    %c0_i32 = arith.constant 0 : i32
    %0 = arith.cmpi eq, %arg1, %c0_i32 : i32
    %1 = arith.extui %0 : i1 to i32
    %c0_i32_0 = arith.constant 0 : i32
    %2 = arith.cmpi ne, %1, %c0_i32_0 : i32
    scf.if %2 {
      %cst_17 = arith.constant 0.000000e+00 : f32
      %23 = vector.broadcast %cst_17 : f32 to vector<16x16xf32>
      %c0_18 = arith.constant 0 : index
      %c0_19 = arith.constant 0 : index
      %24 = vector.load %arg5[%c0_18, %c0_19] : memref<16x16xf32, #tpu.memory_space<vmem>>, vector<16x16xf32>
      tpu.vector_store %arg5[%c0_18, %c0_19], %23 {strides = array<i32>} : memref<16x16xf32, #tpu.memory_space<vmem>>, vector<16x16xf32>,
      %cst_20 = arith.constant 0.000000e+00 : f32
      %25 = vector.broadcast %cst_20 : f32 to vector<1x1xf32>
      %c0_21 = arith.constant 0 : index
      %c0_22 = arith.constant 0 : index
      %26 = vector.load %arg6[%c0_21, %c0_22] : memref<1x1xf32, #tpu.memory_space<vmem>>, vector<1x1xf32>
      tpu.vector_store %arg6[%c0_21, %c0_22], %25 {strides = array<i32>} : memref<1x1xf32, #tpu.memory_space<vmem>>, vector<1x1xf32>,
    } else {
    }
    %c0 = arith.constant 0 : index
    %c0_1 = arith.constant 0 : index
    %c0_2 = arith.constant 0 : index
    %3 = vector.load %arg2[%c0, %c0_1, %c0_2] : memref<1x16x512xf32, #tpu.memory_space<vmem>>, vector<1x16x512xf32>
    %4 = vector.shape_cast %3 : vector<1x16x512xf32> to vector<16x512xf32>
    %c0_3 = arith.constant 0 : index
    %c0_4 = arith.constant 0 : index
    %c0_5 = arith.constant 0 : index
    %5 = vector.load %arg3[%c0_3, %c0_4, %c0_5] : memref<1x1x512xf32, #tpu.memory_space<vmem>>, vector<1x1x512xf32>
    %6 = vector.shape_cast %5 : vector<1x1x512xf32> to vector<1x512xf32>
    %c0_6 = arith.constant 0 : index
    %c0_7 = arith.constant 0 : index
    %7 = vector.load %arg5[%c0_6, %c0_7] : memref<16x16xf32, #tpu.memory_space<vmem>>, vector<16x16xf32>
    %cst = arith.constant dense<0.000000e+00> : vector<16x16xf32>
    %8 = tpu.matmul %4, %4, %cst {dimension_numbers = #tpu.dot_dimension_numbers<[1], [1], [0], [0], [0, 0, 1, 0], [], []>} : vector<16x512xf32>, vector<16x512xf32>, vector<16x16xf32> -> vector<16x16xf32>
    %9 = arith.addf %7, %8 : vector<16x16xf32>
    %c0_8 = arith.constant 0 : index
    %c0_9 = arith.constant 0 : index
    %10 = vector.load %arg5[%c0_8, %c0_9] : memref<16x16xf32, #tpu.memory_space<vmem>>, vector<16x16xf32>
    tpu.vector_store %arg5[%c0_8, %c0_9], %9 {strides = array<i32>} : memref<16x16xf32, #tpu.memory_space<vmem>>, vector<16x16xf32>,
    %c0_10 = arith.constant 0 : index
    %c0_11 = arith.constant 0 : index
    %11 = vector.load %arg6[%c0_10, %c0_11] : memref<1x1xf32, #tpu.memory_space<vmem>>, vector<1x1xf32>
    %12 = arith.mulf %6, %6 : vector<1x512xf32>
    %13 = vector.shape_cast %12 : vector<1x512xf32> to vector<1x1x512xf32>
    %cst_12 = arith.constant dense<0.000000e+00> : vector<1xf32>
    %14 = vector.multi_reduction <add>, %13, %cst_12 [1, 2] : vector<1x1x512xf32> to vector<1xf32>
    %15 = vector.shape_cast %14 : vector<1xf32> to vector<1x1x1xf32>
    %16 = vector.extract %15[0, 0, 0] : f32 from vector<1x1x1xf32>
    %17 = vector.broadcast %16 : f32 to vector<1x1xf32>
    %18 = arith.addf %11, %17 : vector<1x1xf32>
    %c0_13 = arith.constant 0 : index
    %c0_14 = arith.constant 0 : index
    %19 = vector.load %arg6[%c0_13, %c0_14] : memref<1x1xf32, #tpu.memory_space<vmem>>, vector<1x1xf32>
    tpu.vector_store %arg6[%c0_13, %c0_14], %18 {strides = array<i32>} : memref<1x1xf32, #tpu.memory_space<vmem>>, vector<1x1xf32>,
    %c0_i32_15 = arith.constant 0 : i32
    %20 = arith.cmpi eq, %arg1, %c0_i32_15 : i32
    %21 = arith.extui %20 : i1 to i32
    %c0_i32_16 = arith.constant 0 : i32
    %22 = arith.cmpi ne, %21, %c0_i32_16 : i32
    scf.if %22 {
      %c0_17 = arith.constant 0 : index
      %c0_18 = arith.constant 0 : index
      %23 = vector.load %arg5[%c0_17, %c0_18] : memref<16x16xf32, #tpu.memory_space<vmem>>, vector<16x16xf32>
      %cst_19 = arith.constant 0.001953125 : f32
      %24 = vector.broadcast %cst_19 : f32 to vector<16x16xf32>
      %25 = arith.mulf %23, %24 : vector<16x16xf32>
      %c0_20 = arith.constant 0 : index
      %c0_21 = arith.constant 0 : index
      %26 = vector.load %arg6[%c0_20, %c0_21] : memref<1x1xf32, #tpu.memory_space<vmem>>, vector<1x1xf32>
      %cst_22 = arith.constant 0.001953125 : f32
      %27 = vector.broadcast %cst_22 : f32 to vector<1x1xf32>
      %28 = arith.mulf %26, %27 : vector<1x1xf32>
      %29 = vector.broadcast %28 : vector<1x1xf32> to vector<16x16xf32>
      %30 = arith.subf %25, %29 : vector<16x16xf32>
      %31 = arith.mulf %30, %30 : vector<16x16xf32>
      %32 = vector.shape_cast %31 : vector<16x16xf32> to vector<1x16x16xf32>
      %cst_23 = arith.constant dense<0.000000e+00> : vector<1xf32>
      %33 = vector.multi_reduction <add>, %32, %cst_23 [1, 2] : vector<1x16x16xf32> to vector<1xf32>
      %34 = vector.shape_cast %33 : vector<1xf32> to vector<1x1x1xf32>
      %35 = vector.extract %34[0, 0, 0] : f32 from vector<1x1x1xf32>
      %36 = vector.broadcast %35 : f32 to vector<1x1x1xf32>
      %c0_24 = arith.constant 0 : index
      %c0_25 = arith.constant 0 : index
      %c0_26 = arith.constant 0 : index
      %37 = vector.load %arg4[%c0_24, %c0_25, %c0_26] : memref<1x1x1xf32, #tpu.memory_space<vmem>>, vector<1x1x1xf32>
      tpu.vector_store %arg4[%c0_24, %c0_25, %c0_26], %36 {strides = array<i32>} : memref<1x1x1xf32, #tpu.memory_space<vmem>>, vector<1x1x1xf32>,
    } else {
    }
    return
  }
  func.func @transform_0(%arg0: i32, %arg1: i32) -> (i32, i32, i32) {
    %c0_i32 = arith.constant 0 : i32
    %c0_i32_0 = arith.constant 0 : i32
    return %arg0, %c0_i32, %arg1 : i32, i32, i32
  }
  func.func @transform_1(%arg0: i32, %arg1: i32) -> (i32, i32, i32) {
    %c0_i32 = arith.constant 0 : i32
    %c0_i32_0 = arith.constant 0 : i32
    return %arg0, %c0_i32, %arg1 : i32, i32, i32
  }
  func.func @transform_2(%arg0: i32, %arg1: i32) -> (i32, i32, i32) {
    %c0_i32 = arith.constant 0 : i32
    %c0_i32_0 = arith.constant 0 : i32
    %c0_i32_1 = arith.constant 0 : i32
    return %arg0, %c0_i32, %c0_i32_0 : i32, i32, i32
  }
}

module attributes {stable_mosaic.version = 11 : i64} {
  func.func @_style_kernel(%arg0: i32, %arg1: i32, %arg2: memref<1x8x2048xf32, #tpu.memory_space<vmem>>, %arg3: memref<1x1x2048xf32, #tpu.memory_space<vmem>>, %arg4: memref<1x1x1xf32, #tpu.memory_space<vmem>>, %arg5: memref<8x8xf32, #tpu.memory_space<vmem>>, %arg6: memref<1x1xf32, #tpu.memory_space<vmem>>) attributes {dimension_semantics = [#tpu.dimension_semantics<parallel>, #tpu.dimension_semantics<arbitrary>], iteration_bounds = array<i64: 2, 2>, scalar_prefetch = 0 : i64, scratch_operands = 2 : i64, tpu.core_type = #tpu.core_type<tc>, window_params = [{transform_indices = @transform_0, window_bounds = array<i64: 1, 8, 2048>}, {transform_indices = @transform_1, window_bounds = array<i64: 1, 1, 2048>}, {transform_indices = @transform_2, window_bounds = array<i64: 1, 1, 1>}]} {
    %c0_i32 = arith.constant 0 : i32
    %0 = arith.cmpi eq, %arg1, %c0_i32 : i32
    %1 = arith.extui %0 : i1 to i32
    %c0_i32_0 = arith.constant 0 : i32
    %2 = arith.cmpi ne, %1, %c0_i32_0 : i32
    scf.if %2 {
      %cst_16 = arith.constant 0.000000e+00 : f32
      %23 = vector.broadcast %cst_16 : f32 to vector<8x8xf32>
      %c0_17 = arith.constant 0 : index
      %c0_18 = arith.constant 0 : index
      %24 = vector.load %arg5[%c0_17, %c0_18] : memref<8x8xf32, #tpu.memory_space<vmem>>, vector<8x8xf32>
      tpu.vector_store %arg5[%c0_17, %c0_18], %23 {strides = array<i32>} : memref<8x8xf32, #tpu.memory_space<vmem>>, vector<8x8xf32>,
      %cst_19 = arith.constant 0.000000e+00 : f32
      %25 = vector.broadcast %cst_19 : f32 to vector<1x1xf32>
      %c0_20 = arith.constant 0 : index
      %c0_21 = arith.constant 0 : index
      %26 = vector.load %arg6[%c0_20, %c0_21] : memref<1x1xf32, #tpu.memory_space<vmem>>, vector<1x1xf32>
      tpu.vector_store %arg6[%c0_20, %c0_21], %25 {strides = array<i32>} : memref<1x1xf32, #tpu.memory_space<vmem>>, vector<1x1xf32>,
    } else {
    }
    %c0 = arith.constant 0 : index
    %c0_1 = arith.constant 0 : index
    %c0_2 = arith.constant 0 : index
    %3 = vector.load %arg2[%c0, %c0_1, %c0_2] : memref<1x8x2048xf32, #tpu.memory_space<vmem>>, vector<1x8x2048xf32>
    %4 = vector.shape_cast %3 : vector<1x8x2048xf32> to vector<8x2048xf32>
    %c0_3 = arith.constant 0 : index
    %c0_4 = arith.constant 0 : index
    %c0_5 = arith.constant 0 : index
    %5 = vector.load %arg3[%c0_3, %c0_4, %c0_5] : memref<1x1x2048xf32, #tpu.memory_space<vmem>>, vector<1x1x2048xf32>
    %6 = vector.shape_cast %5 : vector<1x1x2048xf32> to vector<1x2048xf32>
    %c0_6 = arith.constant 0 : index
    %c0_7 = arith.constant 0 : index
    %7 = vector.load %arg5[%c0_6, %c0_7] : memref<8x8xf32, #tpu.memory_space<vmem>>, vector<8x8xf32>
    %cst = arith.constant dense<0.000000e+00> : vector<8x8xf32>
    %8 = tpu.matmul %4, %4, %cst {dimension_numbers = #tpu.dot_dimension_numbers<[1], [1], [0], [0], [0, 0, 1, 0], [], []>} : vector<8x2048xf32>, vector<8x2048xf32>, vector<8x8xf32> -> vector<8x8xf32>
    %9 = arith.addf %7, %8 : vector<8x8xf32>
    %c0_8 = arith.constant 0 : index
    %c0_9 = arith.constant 0 : index
    %10 = vector.load %arg5[%c0_8, %c0_9] : memref<8x8xf32, #tpu.memory_space<vmem>>, vector<8x8xf32>
    tpu.vector_store %arg5[%c0_8, %c0_9], %9 {strides = array<i32>} : memref<8x8xf32, #tpu.memory_space<vmem>>, vector<8x8xf32>,
    %c0_10 = arith.constant 0 : index
    %c0_11 = arith.constant 0 : index
    %11 = vector.load %arg6[%c0_10, %c0_11] : memref<1x1xf32, #tpu.memory_space<vmem>>, vector<1x1xf32>
    %12 = arith.mulf %6, %6 : vector<1x2048xf32>
    %13 = vector.shape_cast %12 : vector<1x2048xf32> to vector<1x1x2048xf32>
    %cst_12 = arith.constant dense<0.000000e+00> : vector<1xf32>
    %14 = vector.multi_reduction <add>, %13, %cst_12 [1, 2] : vector<1x1x2048xf32> to vector<1xf32>
    %15 = vector.shape_cast %14 : vector<1xf32> to vector<1x1x1xf32>
    %16 = vector.extract %15[0, 0, 0] : f32 from vector<1x1x1xf32>
    %17 = vector.broadcast %16 : f32 to vector<1x1xf32>
    %18 = arith.addf %11, %17 : vector<1x1xf32>
    %c0_13 = arith.constant 0 : index
    %c0_14 = arith.constant 0 : index
    %19 = vector.load %arg6[%c0_13, %c0_14] : memref<1x1xf32, #tpu.memory_space<vmem>>, vector<1x1xf32>
    tpu.vector_store %arg6[%c0_13, %c0_14], %18 {strides = array<i32>} : memref<1x1xf32, #tpu.memory_space<vmem>>, vector<1x1xf32>,
    %c1_i32 = arith.constant 1 : i32
    %20 = arith.cmpi eq, %arg1, %c1_i32 : i32
    %21 = arith.extui %20 : i1 to i32
    %c0_i32_15 = arith.constant 0 : i32
    %22 = arith.cmpi ne, %21, %c0_i32_15 : i32
    scf.if %22 {
      %c0_16 = arith.constant 0 : index
      %c0_17 = arith.constant 0 : index
      %23 = vector.load %arg5[%c0_16, %c0_17] : memref<8x8xf32, #tpu.memory_space<vmem>>, vector<8x8xf32>
      %cst_18 = arith.constant 2.44140625E-4 : f32
      %24 = vector.broadcast %cst_18 : f32 to vector<8x8xf32>
      %25 = arith.mulf %23, %24 : vector<8x8xf32>
      %c0_19 = arith.constant 0 : index
      %c0_20 = arith.constant 0 : index
      %26 = vector.load %arg6[%c0_19, %c0_20] : memref<1x1xf32, #tpu.memory_space<vmem>>, vector<1x1xf32>
      %cst_21 = arith.constant 2.44140625E-4 : f32
      %27 = vector.broadcast %cst_21 : f32 to vector<1x1xf32>
      %28 = arith.mulf %26, %27 : vector<1x1xf32>
      %29 = vector.broadcast %28 : vector<1x1xf32> to vector<8x8xf32>
      %30 = arith.subf %25, %29 : vector<8x8xf32>
      %31 = arith.mulf %30, %30 : vector<8x8xf32>
      %32 = vector.shape_cast %31 : vector<8x8xf32> to vector<1x8x8xf32>
      %cst_22 = arith.constant dense<0.000000e+00> : vector<1xf32>
      %33 = vector.multi_reduction <add>, %32, %cst_22 [1, 2] : vector<1x8x8xf32> to vector<1xf32>
      %34 = vector.shape_cast %33 : vector<1xf32> to vector<1x1x1xf32>
      %35 = vector.extract %34[0, 0, 0] : f32 from vector<1x1x1xf32>
      %36 = vector.broadcast %35 : f32 to vector<1x1x1xf32>
      %c0_23 = arith.constant 0 : index
      %c0_24 = arith.constant 0 : index
      %c0_25 = arith.constant 0 : index
      %37 = vector.load %arg4[%c0_23, %c0_24, %c0_25] : memref<1x1x1xf32, #tpu.memory_space<vmem>>, vector<1x1x1xf32>
      tpu.vector_store %arg4[%c0_23, %c0_24, %c0_25], %36 {strides = array<i32>} : memref<1x1x1xf32, #tpu.memory_space<vmem>>, vector<1x1x1xf32>,
    } else {
    }
    return
  }
  func.func @transform_0(%arg0: i32, %arg1: i32) -> (i32, i32, i32) {
    %c0_i32 = arith.constant 0 : i32
    %c0_i32_0 = arith.constant 0 : i32
    return %arg0, %c0_i32, %arg1 : i32, i32, i32
  }
  func.func @transform_1(%arg0: i32, %arg1: i32) -> (i32, i32, i32) {
    %c0_i32 = arith.constant 0 : i32
    %c0_i32_0 = arith.constant 0 : i32
    return %arg0, %c0_i32, %arg1 : i32, i32, i32
  }
  func.func @transform_2(%arg0: i32, %arg1: i32) -> (i32, i32, i32) {
    %c0_i32 = arith.constant 0 : i32
    %c0_i32_0 = arith.constant 0 : i32
    %c0_i32_1 = arith.constant 0 : i32
    return %arg0, %c0_i32, %c0_i32_0 : i32, i32, i32
  }
}

module attributes {stable_mosaic.version = 11 : i64} {
  func.func @_style_kernel(%arg0: i32, %arg1: i32, %arg2: memref<1x32x64xf32, #tpu.memory_space<vmem>>, %arg3: memref<1x1x64xf32, #tpu.memory_space<vmem>>, %arg4: memref<1x1x1xf32, #tpu.memory_space<vmem>>, %arg5: memref<32x32xf32, #tpu.memory_space<vmem>>, %arg6: memref<1x1xf32, #tpu.memory_space<vmem>>) attributes {dimension_semantics = [#tpu.dimension_semantics<parallel>, #tpu.dimension_semantics<arbitrary>], iteration_bounds = array<i64: 2, 1>, scalar_prefetch = 0 : i64, scratch_operands = 2 : i64, tpu.core_type = #tpu.core_type<tc>, window_params = [{transform_indices = @transform_0, window_bounds = array<i64: 1, 32, 64>}, {transform_indices = @transform_1, window_bounds = array<i64: 1, 1, 64>}, {transform_indices = @transform_2, window_bounds = array<i64: 1, 1, 1>}]} {
    %c0_i32 = arith.constant 0 : i32
    %0 = arith.cmpi eq, %arg1, %c0_i32 : i32
    %1 = arith.extui %0 : i1 to i32
    %c0_i32_0 = arith.constant 0 : i32
    %2 = arith.cmpi ne, %1, %c0_i32_0 : i32
    scf.if %2 {
      %cst_17 = arith.constant 0.000000e+00 : f32
      %23 = vector.broadcast %cst_17 : f32 to vector<32x32xf32>
      %c0_18 = arith.constant 0 : index
      %c0_19 = arith.constant 0 : index
      %24 = vector.load %arg5[%c0_18, %c0_19] : memref<32x32xf32, #tpu.memory_space<vmem>>, vector<32x32xf32>
      tpu.vector_store %arg5[%c0_18, %c0_19], %23 {strides = array<i32>} : memref<32x32xf32, #tpu.memory_space<vmem>>, vector<32x32xf32>,
      %cst_20 = arith.constant 0.000000e+00 : f32
      %25 = vector.broadcast %cst_20 : f32 to vector<1x1xf32>
      %c0_21 = arith.constant 0 : index
      %c0_22 = arith.constant 0 : index
      %26 = vector.load %arg6[%c0_21, %c0_22] : memref<1x1xf32, #tpu.memory_space<vmem>>, vector<1x1xf32>
      tpu.vector_store %arg6[%c0_21, %c0_22], %25 {strides = array<i32>} : memref<1x1xf32, #tpu.memory_space<vmem>>, vector<1x1xf32>,
    } else {
    }
    %c0 = arith.constant 0 : index
    %c0_1 = arith.constant 0 : index
    %c0_2 = arith.constant 0 : index
    %3 = vector.load %arg2[%c0, %c0_1, %c0_2] : memref<1x32x64xf32, #tpu.memory_space<vmem>>, vector<1x32x64xf32>
    %4 = vector.shape_cast %3 : vector<1x32x64xf32> to vector<32x64xf32>
    %c0_3 = arith.constant 0 : index
    %c0_4 = arith.constant 0 : index
    %c0_5 = arith.constant 0 : index
    %5 = vector.load %arg3[%c0_3, %c0_4, %c0_5] : memref<1x1x64xf32, #tpu.memory_space<vmem>>, vector<1x1x64xf32>
    %6 = vector.shape_cast %5 : vector<1x1x64xf32> to vector<1x64xf32>
    %c0_6 = arith.constant 0 : index
    %c0_7 = arith.constant 0 : index
    %7 = vector.load %arg5[%c0_6, %c0_7] : memref<32x32xf32, #tpu.memory_space<vmem>>, vector<32x32xf32>
    %cst = arith.constant dense<0.000000e+00> : vector<32x32xf32>
    %8 = tpu.matmul %4, %4, %cst {dimension_numbers = #tpu.dot_dimension_numbers<[1], [1], [0], [0], [0, 0, 1, 0], [], []>} : vector<32x64xf32>, vector<32x64xf32>, vector<32x32xf32> -> vector<32x32xf32>
    %9 = arith.addf %7, %8 : vector<32x32xf32>
    %c0_8 = arith.constant 0 : index
    %c0_9 = arith.constant 0 : index
    %10 = vector.load %arg5[%c0_8, %c0_9] : memref<32x32xf32, #tpu.memory_space<vmem>>, vector<32x32xf32>
    tpu.vector_store %arg5[%c0_8, %c0_9], %9 {strides = array<i32>} : memref<32x32xf32, #tpu.memory_space<vmem>>, vector<32x32xf32>,
    %c0_10 = arith.constant 0 : index
    %c0_11 = arith.constant 0 : index
    %11 = vector.load %arg6[%c0_10, %c0_11] : memref<1x1xf32, #tpu.memory_space<vmem>>, vector<1x1xf32>
    %12 = arith.mulf %6, %6 : vector<1x64xf32>
    %13 = vector.shape_cast %12 : vector<1x64xf32> to vector<1x1x64xf32>
    %cst_12 = arith.constant dense<0.000000e+00> : vector<1xf32>
    %14 = vector.multi_reduction <add>, %13, %cst_12 [1, 2] : vector<1x1x64xf32> to vector<1xf32>
    %15 = vector.shape_cast %14 : vector<1xf32> to vector<1x1x1xf32>
    %16 = vector.extract %15[0, 0, 0] : f32 from vector<1x1x1xf32>
    %17 = vector.broadcast %16 : f32 to vector<1x1xf32>
    %18 = arith.addf %11, %17 : vector<1x1xf32>
    %c0_13 = arith.constant 0 : index
    %c0_14 = arith.constant 0 : index
    %19 = vector.load %arg6[%c0_13, %c0_14] : memref<1x1xf32, #tpu.memory_space<vmem>>, vector<1x1xf32>
    tpu.vector_store %arg6[%c0_13, %c0_14], %18 {strides = array<i32>} : memref<1x1xf32, #tpu.memory_space<vmem>>, vector<1x1xf32>,
    %c0_i32_15 = arith.constant 0 : i32
    %20 = arith.cmpi eq, %arg1, %c0_i32_15 : i32
    %21 = arith.extui %20 : i1 to i32
    %c0_i32_16 = arith.constant 0 : i32
    %22 = arith.cmpi ne, %21, %c0_i32_16 : i32
    scf.if %22 {
      %c0_17 = arith.constant 0 : index
      %c0_18 = arith.constant 0 : index
      %23 = vector.load %arg5[%c0_17, %c0_18] : memref<32x32xf32, #tpu.memory_space<vmem>>, vector<32x32xf32>
      %cst_19 = arith.constant 1.562500e-02 : f32
      %24 = vector.broadcast %cst_19 : f32 to vector<32x32xf32>
      %25 = arith.mulf %23, %24 : vector<32x32xf32>
      %c0_20 = arith.constant 0 : index
      %c0_21 = arith.constant 0 : index
      %26 = vector.load %arg6[%c0_20, %c0_21] : memref<1x1xf32, #tpu.memory_space<vmem>>, vector<1x1xf32>
      %cst_22 = arith.constant 1.562500e-02 : f32
      %27 = vector.broadcast %cst_22 : f32 to vector<1x1xf32>
      %28 = arith.mulf %26, %27 : vector<1x1xf32>
      %29 = vector.broadcast %28 : vector<1x1xf32> to vector<32x32xf32>
      %30 = arith.subf %25, %29 : vector<32x32xf32>
      %31 = arith.mulf %30, %30 : vector<32x32xf32>
      %32 = vector.shape_cast %31 : vector<32x32xf32> to vector<1x32x32xf32>
      %cst_23 = arith.constant dense<0.000000e+00> : vector<1xf32>
      %33 = vector.multi_reduction <add>, %32, %cst_23 [1, 2] : vector<1x32x32xf32> to vector<1xf32>
      %34 = vector.shape_cast %33 : vector<1xf32> to vector<1x1x1xf32>
      %35 = vector.extract %34[0, 0, 0] : f32 from vector<1x1x1xf32>
      %36 = vector.broadcast %35 : f32 to vector<1x1x1xf32>
      %c0_24 = arith.constant 0 : index
      %c0_25 = arith.constant 0 : index
      %c0_26 = arith.constant 0 : index
      %37 = vector.load %arg4[%c0_24, %c0_25, %c0_26] : memref<1x1x1xf32, #tpu.memory_space<vmem>>, vector<1x1x1xf32>
      tpu.vector_store %arg4[%c0_24, %c0_25, %c0_26], %36 {strides = array<i32>} : memref<1x1x1xf32, #tpu.memory_space<vmem>>, vector<1x1x1xf32>,
    } else {
    }
    return
  }
  func.func @transform_0(%arg0: i32, %arg1: i32) -> (i32, i32, i32) {
    %c0_i32 = arith.constant 0 : i32
    %c0_i32_0 = arith.constant 0 : i32
    return %arg0, %c0_i32, %arg1 : i32, i32, i32
  }
  func.func @transform_1(%arg0: i32, %arg1: i32) -> (i32, i32, i32) {
    %c0_i32 = arith.constant 0 : i32
    %c0_i32_0 = arith.constant 0 : i32
    return %arg0, %c0_i32, %arg1 : i32, i32, i32
  }
  func.func @transform_2(%arg0: i32, %arg1: i32) -> (i32, i32, i32) {
    %c0_i32 = arith.constant 0 : i32
    %c0_i32_0 = arith.constant 0 : i32
    %c0_i32_1 = arith.constant 0 : i32
    return %arg0, %c0_i32, %c0_i32_0 : i32, i32, i32
  }
}

module attributes {stable_mosaic.version = 11 : i64} {
  func.func @_mse_l1_kernel(%arg0: i32, %arg1: memref<8x1024xf32, #tpu.memory_space<vmem>>, %arg2: memref<8x1024xf32, #tpu.memory_space<vmem>>, %arg3: memref<1x1x1xf32, #tpu.memory_space<vmem>>, %arg4: memref<1x1x1xf32, #tpu.memory_space<vmem>>) attributes {dimension_semantics = [#tpu.dimension_semantics<parallel>], iteration_bounds = array<i64: 1>, scalar_prefetch = 0 : i64, scratch_operands = 0 : i64, tpu.core_type = #tpu.core_type<tc>, window_params = [{transform_indices = @transform_0, window_bounds = array<i64: 8, 1024>}, {transform_indices = @transform_1, window_bounds = array<i64: 8, 1024>}, {transform_indices = @transform_2, window_bounds = array<i64: 1, 1, 1>}, {transform_indices = @transform_3, window_bounds = array<i64: 1, 1, 1>}]} {
    %c0 = arith.constant 0 : index
    %c0_0 = arith.constant 0 : index
    %0 = vector.load %arg1[%c0, %c0_0] : memref<8x1024xf32, #tpu.memory_space<vmem>>, vector<8x1024xf32>
    %c0_1 = arith.constant 0 : index
    %c0_2 = arith.constant 0 : index
    %1 = vector.load %arg2[%c0_1, %c0_2] : memref<8x1024xf32, #tpu.memory_space<vmem>>, vector<8x1024xf32>
    %2 = arith.subf %0, %1 : vector<8x1024xf32>
    %3 = arith.mulf %2, %2 : vector<8x1024xf32>
    %4 = vector.shape_cast %3 : vector<8x1024xf32> to vector<1x8x1024xf32>
    %cst = arith.constant dense<0.000000e+00> : vector<1xf32>
    %5 = vector.multi_reduction <add>, %4, %cst [1, 2] : vector<1x8x1024xf32> to vector<1xf32>
    %6 = vector.shape_cast %5 : vector<1xf32> to vector<1x1x1xf32>
    %7 = vector.extract %6[0, 0, 0] : f32 from vector<1x1x1xf32>
    %8 = vector.broadcast %7 : f32 to vector<1x1x1xf32>
    %c0_3 = arith.constant 0 : index
    %c0_4 = arith.constant 0 : index
    %c0_5 = arith.constant 0 : index
    %9 = vector.load %arg3[%c0_3, %c0_4, %c0_5] : memref<1x1x1xf32, #tpu.memory_space<vmem>>, vector<1x1x1xf32>
    tpu.vector_store %arg3[%c0_3, %c0_4, %c0_5], %8 {strides = array<i32>} : memref<1x1x1xf32, #tpu.memory_space<vmem>>, vector<1x1x1xf32>,
    %10 = math.absf %2 : vector<8x1024xf32>
    %11 = vector.shape_cast %10 : vector<8x1024xf32> to vector<1x8x1024xf32>
    %cst_6 = arith.constant dense<0.000000e+00> : vector<1xf32>
    %12 = vector.multi_reduction <add>, %11, %cst_6 [1, 2] : vector<1x8x1024xf32> to vector<1xf32>
    %13 = vector.shape_cast %12 : vector<1xf32> to vector<1x1x1xf32>
    %14 = vector.extract %13[0, 0, 0] : f32 from vector<1x1x1xf32>
    %15 = vector.broadcast %14 : f32 to vector<1x1x1xf32>
    %c0_7 = arith.constant 0 : index
    %c0_8 = arith.constant 0 : index
    %c0_9 = arith.constant 0 : index
    %16 = vector.load %arg4[%c0_7, %c0_8, %c0_9] : memref<1x1x1xf32, #tpu.memory_space<vmem>>, vector<1x1x1xf32>
    tpu.vector_store %arg4[%c0_7, %c0_8, %c0_9], %15 {strides = array<i32>} : memref<1x1x1xf32, #tpu.memory_space<vmem>>, vector<1x1x1xf32>,
    return
  }
  func.func @transform_0(%arg0: i32) -> (i32, i32) {
    %c0_i32 = arith.constant 0 : i32
    %c0_i32_0 = arith.constant 0 : i32
    return %arg0, %c0_i32 : i32, i32
  }
  func.func @transform_1(%arg0: i32) -> (i32, i32) {
    %c0_i32 = arith.constant 0 : i32
    %c0_i32_0 = arith.constant 0 : i32
    return %arg0, %c0_i32 : i32, i32
  }
  func.func @transform_2(%arg0: i32) -> (i32, i32, i32) {
    %c0_i32 = arith.constant 0 : i32
    %c0_i32_0 = arith.constant 0 : i32
    %c0_i32_1 = arith.constant 0 : i32
    return %arg0, %c0_i32, %c0_i32_0 : i32, i32, i32
  }
  func.func @transform_3(%arg0: i32) -> (i32, i32, i32) {
    %c0_i32 = arith.constant 0 : i32
    %c0_i32_0 = arith.constant 0 : i32
    %c0_i32_1 = arith.constant 0 : i32
    return %arg0, %c0_i32, %c0_i32_0 : i32, i32, i32
  }
}

</mosaic_0001>

<llo_original>
// kernel: multi_scale_loss.6
$region0: #{multi_scale_loss.6}
  #allocation0 [shape = 'u32[]', space=smem, size = 0x4, offset = 0x4, fixed_abs, tag = 'smem constant byte address 0x4 - core index']
  #allocation1 [shape = 'u32[144,128]{1,0:T(1,128)}', space=vmem, size = 0x12000, scoped, tag = 'internal scratch']
  #allocation2 [shape = 'f32[16,16]{1,0:T(8,128)}', space=vmem, size = 0x2000, scoped, tag = 'scratch operand']
  #allocation3 [shape = 'f32[1,1]{1,0:T(1,128)}', space=vmem, size = 0x200, scoped, tag = 'scratch operand']
  %s0 = inlined_call_operand.vmem [shape: f32[2,16,512], index: 0, kind: input, shape index: {}]
  %s1 = inlined_call_operand.vmem [shape: f32[2,1,512], index: 1, kind: input, shape index: {}]
  %s2 = inlined_call_operand.vmem [shape: f32[2,1,1], index: 2, kind: output, shape index: {}]
  %s3 = sld [smem:[#allocation0]]
  $region49: #{multi_scale_loss.6} parent=0
    _
  %s5 = ssub.s32 1, %s3
  %s6 = scalar_select 0, %s5, %s3
  loop: start=0, step=1, limit=4
  $region2: #{multi_scale_loss.6} parent=0 // loop_pre_header
    _
  $region3: #{multi_scale_loss.6} parent=0 // loop_header
    %s8 = sphi 0, %s12
    %p9 = scmp.ge.s32.totalorder %s8, 4
    %s15 = sphi 0, %s27
    %s16 = sphi 0, %s23
    %s17 = sphi 0, %s15
    %s18 = sphi 0, %s16
    %s19 = sphi 0, %s17
    %s20 = sphi 0, %s18
    %s32 = sphi 0, %s34
    %s35 = sphi 0, %s32
    %s36 = sphi 0, %s35
    %s52 = sphi 0, %s36
    %s60 = sphi 0, %s62
    %s63 = sphi 0, %s60
    %s64 = sphi 0, %s63
    %s80 = sphi 0, %s64
    %s86 = sphi 0, %s88
    %s89 = sphi 0, %s86
    %s90 = sphi 0, %s89
    %s106 = sphi 0, %s90
  $region4: #{multi_scale_loss.6} parent=0 // loop_header_branch
    %11 = sbr.rel (%p9) target = $region8
  $region5: #{multi_scale_loss.6} parent=0 // loop_body
    %s13 = ssub.s32 %s8, 1
    %s14 = ssub.s32 %s8, 2
    %s21 = sadd.s32 1, %s16
    %p22 = scmp.ge.s32.totalorder %s21, 1
    %s23 = scalar_select %p22, 0, %s21
    %s24 = sadd.s32 1, %s15
    %s25 = scalar_select %p22, %s24, %s15
    %p26 = scmp.ge.s32.totalorder %s25, 2
    %s27 = scalar_select %p26, 0, %s25
    %s28 = ssub.s32 %s15, %s27
    %s29 = ssub.s32 %s16, %s23
    %s30 = sor.u32 %s28, %s29
    %p31 = scmp.eq.s32.totalorder %s30, 0
    %s33 = sadd.s32 %s32, 1
    %s34 = scalar_select %p31, %s32, %s33
    %p37 = pneg %p31
    %p38 = scmp.eq.s32.totalorder %s8, 1
    %p39 = por %p37, %p38
    %p40 = scmp.ne.s32.totalorder %s32, %s35
    %p41 = scmp.eq.s32.totalorder %s8, 0
    %p42 = por %p40, %p41
    %p43 = scmp.ne.s32.totalorder %s32, %s35
    %p44 = scmp.eq.s32.totalorder %s13, 1
    %p45 = por %p43, %p44
    %p46 = scmp.ne.s32.totalorder %s35, %s36
    %p47 = scmp.eq.s32.totalorder %s13, 0
    %p48 = por %p46, %p47
    %p49 = scmp.ne.s32.totalorder %s35, %s36
    %p50 = scmp.eq.s32.totalorder %s14, 1
    %p51 = por %p49, %p50
    %p53 = scmp.ne.s32.totalorder %s36, %s52
    %p54 = scmp.eq.s32.totalorder %s14, 0
    %p55 = por %p53, %p54
    %s56 = ssub.s32 %s15, %s27
    %s57 = ssub.s32 %s16, %s23
    %s58 = sor.u32 %s56, %s57
    %p59 = scmp.eq.s32.totalorder %s58, 0
    %s61 = sadd.s32 %s60, 1
    %s62 = scalar_select %p59, %s60, %s61
    %p65 = pneg %p59
    %p66 = scmp.eq.s32.totalorder %s8, 1
    %p67 = por %p65, %p66
    %p68 = scmp.ne.s32.totalorder %s60, %s63
    %p69 = scmp.eq.s32.totalorder %s8, 0
    %p70 = por %p68, %p69
    %p71 = scmp.ne.s32.totalorder %s60, %s63
    %p72 = scmp.eq.s32.totalorder %s13, 1
    %p73 = por %p71, %p72
    %p74 = scmp.ne.s32.totalorder %s63, %s64
    %p75 = scmp.eq.s32.totalorder %s13, 0
    %p76 = por %p74, %p75
    %p77 = scmp.ne.s32.totalorder %s63, %s64
    %p78 = scmp.eq.s32.totalorder %s14, 1
    %p79 = por %p77, %p78
    %p81 = scmp.ne.s32.totalorder %s64, %s80
    %p82 = scmp.eq.s32.totalorder %s14, 0
    %p83 = por %p81, %p82
    %s84 = ssub.s32 %s15, %s27
    %p85 = scmp.eq.s32.totalorder %s84, 0
    %s87 = sadd.s32 %s86, 1
    %s88 = scalar_select %p85, %s86, %s87
    %p91 = pneg %p85
    %p92 = scmp.eq.s32.totalorder %s8, 1
    %p93 = por %p91, %p92
    %p94 = scmp.ne.s32.totalorder %s86, %s89
    %p95 = scmp.eq.s32.totalorder %s8, 0
    %p96 = por %p94, %p95
    %p97 = scmp.ne.s32.totalorder %s86, %s89
    %p98 = scmp.eq.s32.totalorder %s13, 1
    %p99 = por %p97, %p98
    %p100 = scmp.ne.s32.totalorder %s89, %s90
    %p101 = scmp.eq.s32.totalorder %s13, 0
    %p102 = por %p100, %p101
    %p103 = scmp.ne.s32.totalorder %s89, %s90
    %p104 = scmp.eq.s32.totalorder %s14, 1
    %p105 = por %p103, %p104
    %p107 = scmp.ne.s32.totalorder %s90, %s106
    %p108 = scmp.eq.s32.totalorder %s14, 0
    %p109 = por %p107, %p108
    %p110 = scmp.le.s32.totalorder 1, %s8
    %p111 = scmp.lt.s32.totalorder %s8, 3
    %p112 = pnand %p110, %p111
    %p113 = pneg %p112
    // Predicated region
    $region9: #{multi_scale_loss.6} parent=5 // pred_check
      _
    $region10: #{multi_scale_loss.6} parent=5 // pred_check_branch
      %115 = sbr.rel (%p112) target = $region12
    $region11: #{multi_scale_loss.6} parent=5 // pred_region
      %s116 = ssub.s32 %s8, 1
    $region12: #{multi_scale_loss.6} parent=5 // pred_fallthru
      _
    %p117 = scmp.lt.s32.totalorder %s8, 2
    // Predicated region
    $region13: #{multi_scale_loss.6} parent=5 // pred_check
      %p118 = pneg %p117
    $region14: #{multi_scale_loss.6} parent=5 // pred_check_branch
      %120 = sbr.rel (%p118) target = $region16
    $region15: #{multi_scale_loss.6} parent=5 // pred_region
      // Predicated region
      $region17: #{multi_scale_loss.6} parent=15 // pred_check
        %p121 = pneg %p42
      $region18: #{multi_scale_loss.6} parent=15 // pred_check_branch
        %123 = sbr.rel (%p121) target = $region20
      $region19: #{multi_scale_loss.6} parent=15 // pred_region
        %s124 = smul.u32 4, %s16
        %p125 = scmp.lt.s32.totalorder %s15, 1
        %s126 = scalar_select %p125, %s15, 1
        %p127 = scmp.lt.s32.totalorder %s124, 3
        %s128 = scalar_select %p127, %s124, 3
        %s129 = smul.addr %s126, 8
        %s130 = sadd.s32 %s128, %s129
        %s131 = smul.addr %s130, 8
        %s132 = scalar_lea.vmem %s0, %s131
        %s133 = smul.u32 4, %s16
      $region20: #{multi_scale_loss.6} parent=15 // pred_fallthru
        _
      // Predicated region
      $region21: #{multi_scale_loss.6} parent=15 // pred_check
        %p134 = pneg %p70
      $region22: #{multi_scale_loss.6} parent=15 // pred_check_branch
        %136 = sbr.rel (%p134) target = $region24
      $region23: #{multi_scale_loss.6} parent=15 // pred_region
        %s137 = smul.u32 4, %s16
        %p138 = scmp.lt.s32.totalorder %s15, 1
        %s139 = scalar_select %p138, %s15, 1
        %p140 = scmp.lt.s32.totalorder %s137, 3
        %s141 = scalar_select %p140, %s137, 3
        %s142 = smul.addr %s139, 4
        %s143 = sadd.s32 %s141, %s142
        %s144 = scalar_lea.vmem %s1, %s143
        %s145 = smul.u32 4, %s16
      $region24: #{multi_scale_loss.6} parent=15 // pred_fallthru
        _
    $region16: #{multi_scale_loss.6} parent=5 // pred_fallthru
      _
    %p146 = scmp.le.s32.totalorder 1, %s8
    %p147 = scmp.lt.s32.totalorder %s8, 3
    %p148 = pnand %p146, %p147
    %p149 = pneg %p148
    // Predicated region
    $region25: #{multi_scale_loss.6} parent=5 // pred_check
      _
    $region26: #{multi_scale_loss.6} parent=5 // pred_check_branch
      %151 = sbr.rel (%p148) target = $region28
    $region27: #{multi_scale_loss.6} parent=5 // pred_region
      %s152 = ssub.s32 %s8, 1
      %s153 = smul.u32 4, %s18
      %p154 = scmp.lt.s32.totalorder %s17, 1
      %s155 = scalar_select %p154, %s17, 1
      %p156 = scmp.lt.s32.totalorder %s153, 3
      %s157 = scalar_select %p156, %s153, 3
      %s158 = smul.addr %s155, 8
      %s159 = sadd.s32 %s157, %s158
      %s160 = smul.addr %s159, 8
      %s161 = scalar_lea.vmem %s0, %s160
      %p162 = pneg %p48
      %p163 = pneg %p45
      %s164 = smul.u32 4, %s18
      %p165 = scmp.lt.s32.totalorder %s17, 1
      %s166 = scalar_select %p165, %s17, 1
      %p167 = scmp.lt.s32.totalorder %s164, 3
      %s168 = scalar_select %p167, %s164, 3
      %s169 = smul.addr %s166, 4
      %s170 = sadd.s32 %s168, %s169
      %s171 = scalar_lea.vmem %s1, %s170
      %p172 = pneg %p76
      %p173 = pneg %p73
      %p174 = pneg %p102
      %p175 = pneg %p99
      %p176 = scmp.lt.s32.totalorder %s17, 1
      %s177 = scalar_select %p176, %s17, 1
      %s178 = scalar_lea.vmem %s2, %s177
      %s179 = smul.u32 4, %s18
      %p180 = scmp.lt.s32.totalorder %s17, 1
      %s181 = scalar_select %p180, %s17, 1
      %p182 = scmp.lt.s32.totalorder %s179, 3
      %s183 = scalar_select %p182, %s179, 3
      %s184 = smul.addr %s181, 8
      %s185 = sadd.s32 %s183, %s184
      %s186 = smul.addr %s185, 8
      %s187 = scalar_lea.vmem %s0, %s186
      %s188 = smul.u32 4, %s18
      %s189 = smul.u32 4, %s18
      %p190 = scmp.lt.s32.totalorder %s17, 1
      %s191 = scalar_select %p190, %s17, 1
      %p192 = scmp.lt.s32.totalorder %s189, 3
      %s193 = scalar_select %p192, %s189, 3
      %s194 = smul.addr %s191, 4
      %s195 = sadd.s32 %s193, %s194
      %s196 = scalar_lea.vmem %s1, %s195
      %s197 = smul.u32 4, %s18
      %p198 = scmp.lt.s32.totalorder %s17, 1
      %s199 = scalar_select %p198, %s17, 1
      %s200 = scalar_lea.vmem %s2, %s199
      %p201 = scmp.eq.s32.totalorder %s18, 0
      // Predicated region
      $region29: #{multi_scale_loss.6} parent=27 // pred_check
        %p202 = pneg %p201
      $region30: #{multi_scale_loss.6} parent=27 // pred_check_branch
        %204 = sbr.rel (%p202) target = $region32
      $region31: #{multi_scale_loss.6} parent=27 // pred_region
        %vm205 = vcmask 130048
        %206 = vst.msk [vmem:[#allocation2] sm:$0xff] %vm205, 0.0
        %207 = vst.msk [vmem:[#allocation2 + $0x8] sm:$0xff] %vm205, 0.0
        %vm208 = vcmask 0
        %209 = vst.msk [vmem:[#allocation3] sm:$0x1] %vm208, 0.0
      $region32: #{multi_scale_loss.6} parent=27 // pred_fallthru
        _
      %v210 = vld [vmem:[%s187] sm:$0xff]
      %v211 = vld [vmem:[%s187 + $0x8] sm:$0xff]
      %v212 = vld [vmem:[%s187 + $0x10] sm:$0xff]
      %v213 = vld [vmem:[%s187 + $0x18] sm:$0xff]
      %v214 = vld [vmem:[%s187 + $0x20] sm:$0xff]
      %v215 = vld [vmem:[%s187 + $0x28] sm:$0xff]
      %v216 = vld [vmem:[%s187 + $0x30] sm:$0xff]
      %v217 = vld [vmem:[%s187 + $0x38] sm:$0xff]
      %v218 = vld [vmem:[%s196] sm:$0xf]
      %v219 = vld [vmem:[#allocation2] sm:$0xff]
      %v220 = vld [vmem:[#allocation2 + $0x8] sm:$0xff]
      %221 = vmatprep.subr.mxu0 %v211
      %222 = vmatpush1.xpose.msra.mxu0 %v210
      %223 = vmatprep.subr.mxu0 %v215
      %224 = vmatpush1.xpose.msra.mxu0 %v214
      %225 = vmatprep.subr.mxu0 0.0
      %226 = vmatpush1.xpose.msra.mxu0 0.0
      %227 = vmatprep.subr.mxu0 0.0
      %228 = vmatpush1.xpose.msra.mxu0 0.0
      %229 = vmatprep.subr.mxu0 0.0
      %230 = vmatpush1.xpose.msra.mxu0 0.0
      %231 = vmatprep.subr.mxu0 0.0
      %232 = vmatpush1.xpose.msra.mxu0 0.0
      %233 = vmatprep.subr.mxu0 0.0
      %234 = vmatpush1.xpose.msra.mxu0 0.0
      %235 = vmatprep.subr.mxu0 0.0
      %236 = vmatpush1.xpose.msra.mxu0 0.0
      %237 = vmatprep.subr.mxu0 0.0
      %238 = vmatpush1.xpose.msra.mxu0 0.0
      %239 = vmatprep.subr.mxu0 0.0
      %240 = vmatpush1.xpose.msra.mxu0 0.0
      %241 = vmatprep.subr.mxu0 0.0
      %242 = vmatpush1.xpose.msra.mxu0 0.0
      %243 = vmatprep.subr.mxu0 0.0
      %244 = vmatpush1.xpose.msra.mxu0 0.0
      %245 = vmatprep.subr.mxu0 0.0
      %246 = vmatpush1.xpose.msra.mxu0 0.0
      %247 = vmatprep.subr.mxu0 0.0
      %248 = vmatpush1.xpose.msra.mxu0 0.0
      %249 = vmatprep.subr.mxu0 0.0
      %250 = vmatpush1.xpose.msra.mxu0 0.0
      %251 = vmatprep.subr.mxu0 0.0
      %252 = vmatpush1.xpose.msra.mxu0 0.0
      %253 = vmatprep.subr.mxu0 0.0
      %254 = vmatpush1.xpose.msra.mxu0 0.0
      %255 = vmatprep.subr.mxu0 0.0
      %256 = vmatpush1.xpose.msra.mxu0 0.0
      %257 = vmatprep.subr.mxu0 0.0
      %258 = vmatpush1.xpose.msra.mxu0 0.0
      %259 = vmatprep.subr.mxu0 0.0
      %260 = vmatpush1.xpose.msra.mxu0 0.0
      %261 = vmatprep.subr.mxu0 0.0
      %262 = vmatpush1.xpose.msra.mxu0 0.0
      %263 = vmatprep.subr.mxu0 0.0
      %264 = vmatpush1.xpose.msra.mxu0 0.0
      %265 = vmatprep.subr.mxu0 0.0
      %266 = vmatpush1.xpose.msra.mxu0 0.0
      %267 = vmatprep.subr.mxu0 0.0
      %268 = vmatpush1.xpose.msra.mxu0 0.0
      %269 = vmatprep.subr.mxu0 0.0
      %270 = vmatpush1.xpose.msra.mxu0 0.0
      %271 = vmatprep.subr.mxu0 0.0
      %272 = vmatpush1.xpose.msra.mxu0 0.0
      %273 = vmatprep.subr.mxu0 0.0
      %274 = vmatpush1.xpose.msra.mxu0 0.0
      %275 = vmatprep.subr.mxu0 0.0
      %276 = vmatpush1.xpose.msra.mxu0 0.0
      %277 = vmatprep.subr.mxu0 0.0
      %278 = vmatpush1.xpose.msra.mxu0 0.0
      %279 = vmatprep.subr.mxu0 0.0
      %280 = vmatpush1.xpose.msra.mxu0 0.0
      %281 = vmatprep.subr.mxu0 0.0
      %282 = vmatpush1.xpose.msra.mxu0 0.0
      %283 = vmatprep.subr.mxu0 0.0
      %284 = vmatpush1.xpose.msra.mxu0 0.0
      %285 = vmatprep.mubr.f32.mxu0 %v211
      %286 = vmatmul.mubr.f32.gmra.mrb[0].mxu0 %v210
      %v287 = vpop.f32.mrb[0].mxu0
      %v288 = vadd.f32 0.0, %v287
      %v289 = vpop.f32.mrb[0].mxu0
      %290 = vmatprep.mubr.f32.mxu0 %v215
      %291 = vmatmul.mubr.f32.gmra.mrb[0].mxu0 %v214
      %v292 = vpop.f32.mrb[0].mxu0
      %v293 = vadd.f32 0.0, %v292
      %v294 = vpop.f32.mrb[0].mxu0
      %295 = vdwg.mxu0
      %296 = vmatprep.subr.mxu0 %v213
      %297 = vmatpush1.xpose.msra.mxu0 %v212
      %298 = vmatprep.subr.mxu0 %v217
      %299 = vmatpush1.xpose.msra.mxu0 %v216
      %300 = vmatprep.subr.mxu0 0.0
      %301 = vmatpush1.xpose.msra.mxu0 0.0
      %302 = vmatprep.subr.mxu0 0.0
      %303 = vmatpush1.xpose.msra.mxu0 0.0
      %304 = vmatprep.subr.mxu0 0.0
      %305 = vmatpush1.xpose.msra.mxu0 0.0
      %306 = vmatprep.subr.mxu0 0.0
      %307 = vmatpush1.xpose.msra.mxu0 0.0
      %308 = vmatprep.subr.mxu0 0.0
      %309 = vmatpush1.xpose.msra.mxu0 0.0
      %310 = vmatprep.subr.mxu0 0.0
      %311 = vmatpush1.xpose.msra.mxu0 0.0
      %312 = vmatprep.subr.mxu0 0.0
      %313 = vmatpush1.xpose.msra.mxu0 0.0
      %314 = vmatprep.subr.mxu0 0.0
      %315 = vmatpush1.xpose.msra.mxu0 0.0
      %316 = vmatprep.subr.mxu0 0.0
      %317 = vmatpush1.xpose.msra.mxu0 0.0
      %318 = vmatprep.subr.mxu0 0.0
      %319 = vmatpush1.xpose.msra.mxu0 0.0
      %320 = vmatprep.subr.mxu0 0.0
      %321 = vmatpush1.xpose.msra.mxu0 0.0
      %322 = vmatprep.subr.mxu0 0.0
      %323 = vmatpush1.xpose.msra.mxu0 0.0
      %324 = vmatprep.subr.mxu0 0.0
      %325 = vmatpush1.xpose.msra.mxu0 0.0
      %326 = vmatprep.subr.mxu0 0.0
      %327 = vmatpush1.xpose.msra.mxu0 0.0
      %328 = vmatprep.subr.mxu0 0.0
      %329 = vmatpush1.xpose.msra.mxu0 0.0
      %330 = vmatprep.subr.mxu0 0.0
      %331 = vmatpush1.xpose.msra.mxu0 0.0
      %332 = vmatprep.subr.mxu0 0.0
      %333 = vmatpush1.xpose.msra.mxu0 0.0
      %334 = vmatprep.subr.mxu0 0.0
      %335 = vmatpush1.xpose.msra.mxu0 0.0
      %336 = vmatprep.subr.mxu0 0.0
      %337 = vmatpush1.xpose.msra.mxu0 0.0
      %338 = vmatprep.subr.mxu0 0.0
      %339 = vmatpush1.xpose.msra.mxu0 0.0
      %340 = vmatprep.subr.mxu0 0.0
      %341 = vmatpush1.xpose.msra.mxu0 0.0
      %342 = vmatprep.subr.mxu0 0.0
      %343 = vmatpush1.xpose.msra.mxu0 0.0
      %344 = vmatprep.subr.mxu0 0.0
      %345 = vmatpush1.xpose.msra.mxu0 0.0
      %346 = vmatprep.subr.mxu0 0.0
      %347 = vmatpush1.xpose.msra.mxu0 0.0
      %348 = vmatprep.subr.mxu0 0.0
      %349 = vmatpush1.xpose.msra.mxu0 0.0
      %350 = vmatprep.subr.mxu0 0.0
      %351 = vmatpush1.xpose.msra.mxu0 0.0
      %352 = vmatprep.subr.mxu0 0.0
      %353 = vmatpush1.xpose.msra.mxu0 0.0
      %354 = vmatprep.subr.mxu0 0.0
      %355 = vmatpush1.xpose.msra.mxu0 0.0
      %356 = vmatprep.subr.mxu0 0.0
      %357 = vmatpush1.xpose.msra.mxu0 0.0
      %358 = vmatprep.subr.mxu0 0.0
      %359 = vmatpush1.xpose.msra.mxu0 0.0
      %360 = vmatprep.mubr.f32.mxu0 %v213
      %361 = vmatmul.mubr.f32.gmra.mrb[0].mxu0 %v212
      %v362 = vpop.f32.mrb[0].mxu0
      %v363 = vadd.f32 %v288, %v362
      %v364 = vpop.f32.mrb[0].mxu0
      %365 = vmatprep.mubr.f32.mxu0 %v217
      %366 = vmatmul.mubr.f32.gmra.mrb[0].mxu0 %v216
      %v367 = vpop.f32.mrb[0].mxu0
      %v368 = vadd.f32 %v293, %v367
      %v369 = vpop.f32.mrb[0].mxu0
      %370 = vdwg.mxu0
      %v371 = vadd.f32 %v219, %v363
      %v372 = vadd.f32 %v220, %v368
      %vm373 = vcmask 130048
      %374 = vst.msk [vmem:[#allocation2] sm:$0xff] %vm373, %v371
      %375 = vst.msk [vmem:[#allocation2 + $0x8] sm:$0xff] %vm373, %v372
      %v376 = vld [vmem:[#allocation3] sm:$0x1]
      %v377 = vmul.f32 %v218, %v218
      %v379 = vlaneseq
      %v380 = vshrl.u32 %v379, 7
      %v381 = vsub.s32 0, %v380
      %v382 = vrot.slane %v377, %v381
      %v383 = vlaneseq
      %v384 = vshrl.u32 %v383, 7
      %v385 = vsub.s32 1, %v384
      %v386 = vrot.slane %v377, %v385
      %v387 = vlaneseq
      %v388 = vshrl.u32 %v387, 7
      %v389 = vsub.s32 2, %v388
      %v390 = vrot.slane %v377, %v389
      %v391 = vlaneseq
      %v392 = vshrl.u32 %v391, 7
      %v393 = vsub.s32 3, %v392
      %v394 = vrot.slane %v377, %v393
      %vm399 = vcmask 1040384
      %v400 = vsel %vm399, %v382, 0.0
      %v401 = vsel %vm399, %v386, 0.0
      %v402 = vadd.f32 %v400, %v401
      %v403 = vsel %vm399, %v390, 0.0
      %v404 = vadd.f32 %v402, %v403
      %v405 = vsel %vm399, %v394, 0.0
      %v406 = vadd.f32 %v404, %v405
      %407 = vadd.xlane.f32.xlu0 %v406
      %v408 = vpop.xlane.xlu0 %407
      %v409 = vrot.slane %v408, 4
      %v410 = vadd.f32 %v408, %v409
      %v411 = vrot.slane %v410, 2
      %v412 = vadd.f32 %v410, %v411
      %v413 = vrot.slane %v412, 1
      %v414 = vadd.f32 %v412, %v413
      %s415 = vtos %v414
      %v416 = vstv %s415
      %v417 = vadd.f32 %v376, %v416
      %vm418 = vcmask 0
      %419 = vst.msk [vmem:[#allocation3] sm:$0x1] %vm418, %v417
      // Predicated region
      $region33: #{multi_scale_loss.6} parent=27 // pred_check
        %p420 = pneg %p201
      $region34: #{multi_scale_loss.6} parent=27 // pred_check_branch
        %422 = sbr.rel (%p420) target = $region36
      $region35: #{multi_scale_loss.6} parent=27 // pred_region
        %v423 = vld [vmem:[#allocation2] sm:$0xff]
        %v424 = vld [vmem:[#allocation2 + $0x8] sm:$0xff]
        %v425 = vmul.f32 %v423, 0.001953125
        %v426 = vmul.f32 %v424, 0.001953125
        %v427 = vld [vmem:[#allocation3] sm:$0x1]
        %v428 = vmul.f32 %v427, 0.001953125
        %v430 = vlaneseq
        %v431 = vshrl.u32 %v430, 7
        %v432 = vsub.s32 0, %v431
        %v433 = vrot.slane %v428, %v432
        %434 = vset.pattern.permute.xlu0 0
        %435 = vperm.xlu0 %434, %v433
        %v436 = vpop.permute.xlu0 %435
        %v438 = vsub.f32 %v425, %v436
        %v439 = vsub.f32 %v426, %v436
        %v440 = vmul.f32 %v438, %v438
        %v441 = vmul.f32 %v439, %v439
        %v442 = vsel %vm373, %v440, 0.0
        %v443 = vsel %vm373, %v441, 0.0
        %v444 = vadd.f32 %v442, %v443
        %445 = vadd.xlane.f32.xlu0 %v444
        %v446 = vpop.xlane.xlu0 %445
        %v447 = vrot.slane %v446, 4
        %v448 = vadd.f32 %v446, %v447
        %v449 = vrot.slane %v448, 2
        %v450 = vadd.f32 %v448, %v449
        %v451 = vrot.slane %v450, 1
        %v452 = vadd.f32 %v450, %v451
        %s453 = vtos %v452
        %v454 = vstv %s453
        %455 = vst.msk [vmem:[%s200] sm:$0x1] %vm418, %v454
      $region36: #{multi_scale_loss.6} parent=27 // pred_fallthru
        _
      %p456 = scmp.lt.s32.totalorder %s17, 1
      %s457 = scalar_select %p456, %s17, 1
      %s458 = scalar_lea.vmem %s2, %s457
      // Predicated region
      $region37: #{multi_scale_loss.6} parent=27 // pred_check
        %p459 = pneg %p99
      $region38: #{multi_scale_loss.6} parent=27 // pred_check_branch
        %461 = sbr.rel (%p459) target = $region40
      $region39: #{multi_scale_loss.6} parent=27 // pred_region
        _
      $region40: #{multi_scale_loss.6} parent=27 // pred_fallthru
        _
    $region28: #{multi_scale_loss.6} parent=5 // pred_fallthru
      _
    %p462 = scmp.le.s32.totalorder 2, %s8
    // Predicated region
    $region41: #{multi_scale_loss.6} parent=5 // pred_check
      %p463 = pneg %p462
    $region42: #{multi_scale_loss.6} parent=5 // pred_check_branch
      %465 = sbr.rel (%p463) target = $region44
    $region43: #{multi_scale_loss.6} parent=5 // pred_region
      %s466 = ssub.s32 %s8, 2
      // Predicated region
      $region45: #{multi_scale_loss.6} parent=43 // pred_check
        %p467 = pneg %p105
      $region46: #{multi_scale_loss.6} parent=43 // pred_check_branch
        %469 = sbr.rel (%p467) target = $region48
      $region47: #{multi_scale_loss.6} parent=43 // pred_region
        %p470 = scmp.lt.s32.totalorder %s19, 1
        %s471 = scalar_select %p470, %s19, 1
        %s472 = scalar_lea.vmem %s2, %s471
      $region48: #{multi_scale_loss.6} parent=43 // pred_fallthru
        _
    $region44: #{multi_scale_loss.6} parent=5 // pred_fallthru
      _
  $region6: #{multi_scale_loss.6} parent=0 // loop_footer
    %s12 = sadd.s32 1, %s8
  $region7: #{multi_scale_loss.6} parent=0 // loop_footer_branch
    %7 = sbr.rel target = $region3
  $region8: #{multi_scale_loss.6} parent=0 // loop_exit
    _

// kernel: multi_scale_loss.5
$region0: #{multi_scale_loss.5}
  #allocation0 [shape = 'u32[]', space=smem, size = 0x4, offset = 0x4, fixed_abs, tag = 'smem constant byte address 0x4 - core index']
  #allocation1 [shape = 'u32[144,128]{1,0:T(1,128)}', space=vmem, size = 0x12000, scoped, tag = 'internal scratch']
  #allocation2 [shape = 'f32[8,8]{1,0:T(8,128)}', space=vmem, size = 0x1000, scoped, tag = 'scratch operand']
  #allocation3 [shape = 'f32[1,1]{1,0:T(1,128)}', space=vmem, size = 0x200, scoped, tag = 'scratch operand']
  %s0 = inlined_call_operand.vmem [shape: f32[2,8,4096], index: 0, kind: input, shape index: {}]
  %s1 = inlined_call_operand.vmem [shape: f32[2,1,4096], index: 1, kind: input, shape index: {}]
  %s2 = inlined_call_operand.vmem [shape: f32[2,1,1], index: 2, kind: output, shape index: {}]
  %s3 = sld [smem:[#allocation0]]
  $region49: #{multi_scale_loss.5} parent=0
    _
  %s5 = ssub.s32 1, %s3
  %s6 = scalar_select 0, %s5, %s3
  loop: start=0, step=1, limit=6
  $region2: #{multi_scale_loss.5} parent=0 // loop_pre_header
    _
  $region3: #{multi_scale_loss.5} parent=0 // loop_header
    %s8 = sphi 0, %s12
    %p9 = scmp.ge.s32.totalorder %s8, 6
    %s15 = sphi 0, %s27
    %s16 = sphi 0, %s23
    %s17 = sphi 0, %s15
    %s18 = sphi 0, %s16
    %s19 = sphi 0, %s17
    %s20 = sphi 0, %s18
    %s32 = sphi 0, %s34
    %s35 = sphi 0, %s32
    %s36 = sphi 0, %s35
    %s52 = sphi 0, %s36
    %s60 = sphi 0, %s62
    %s63 = sphi 0, %s60
    %s64 = sphi 0, %s63
    %s80 = sphi 0, %s64
    %s86 = sphi 0, %s88
    %s89 = sphi 0, %s86
    %s90 = sphi 0, %s89
    %s106 = sphi 0, %s90
  $region4: #{multi_scale_loss.5} parent=0 // loop_header_branch
    %11 = sbr.rel (%p9) target = $region8
  $region5: #{multi_scale_loss.5} parent=0 // loop_body
    %s13 = ssub.s32 %s8, 1
    %s14 = ssub.s32 %s8, 2
    %s21 = sadd.s32 1, %s16
    %p22 = scmp.ge.s32.totalorder %s21, 2
    %s23 = scalar_select %p22, 0, %s21
    %s24 = sadd.s32 1, %s15
    %s25 = scalar_select %p22, %s24, %s15
    %p26 = scmp.ge.s32.totalorder %s25, 2
    %s27 = scalar_select %p26, 0, %s25
    %s28 = ssub.s32 %s15, %s27
    %s29 = ssub.s32 %s16, %s23
    %s30 = sor.u32 %s28, %s29
    %p31 = scmp.eq.s32.totalorder %s30, 0
    %s33 = sadd.s32 %s32, 1
    %s34 = scalar_select %p31, %s32, %s33
    %p37 = pneg %p31
    %p38 = scmp.eq.s32.totalorder %s8, 3
    %p39 = por %p37, %p38
    %p40 = scmp.ne.s32.totalorder %s32, %s35
    %p41 = scmp.eq.s32.totalorder %s8, 0
    %p42 = por %p40, %p41
    %p43 = scmp.ne.s32.totalorder %s32, %s35
    %p44 = scmp.eq.s32.totalorder %s13, 3
    %p45 = por %p43, %p44
    %p46 = scmp.ne.s32.totalorder %s35, %s36
    %p47 = scmp.eq.s32.totalorder %s13, 0
    %p48 = por %p46, %p47
    %p49 = scmp.ne.s32.totalorder %s35, %s36
    %p50 = scmp.eq.s32.totalorder %s14, 3
    %p51 = por %p49, %p50
    %p53 = scmp.ne.s32.totalorder %s36, %s52
    %p54 = scmp.eq.s32.totalorder %s14, 0
    %p55 = por %p53, %p54
    %s56 = ssub.s32 %s15, %s27
    %s57 = ssub.s32 %s16, %s23
    %s58 = sor.u32 %s56, %s57
    %p59 = scmp.eq.s32.totalorder %s58, 0
    %s61 = sadd.s32 %s60, 1
    %s62 = scalar_select %p59, %s60, %s61
    %p65 = pneg %p59
    %p66 = scmp.eq.s32.totalorder %s8, 3
    %p67 = por %p65, %p66
    %p68 = scmp.ne.s32.totalorder %s60, %s63
    %p69 = scmp.eq.s32.totalorder %s8, 0
    %p70 = por %p68, %p69
    %p71 = scmp.ne.s32.totalorder %s60, %s63
    %p72 = scmp.eq.s32.totalorder %s13, 3
    %p73 = por %p71, %p72
    %p74 = scmp.ne.s32.totalorder %s63, %s64
    %p75 = scmp.eq.s32.totalorder %s13, 0
    %p76 = por %p74, %p75
    %p77 = scmp.ne.s32.totalorder %s63, %s64
    %p78 = scmp.eq.s32.totalorder %s14, 3
    %p79 = por %p77, %p78
    %p81 = scmp.ne.s32.totalorder %s64, %s80
    %p82 = scmp.eq.s32.totalorder %s14, 0
    %p83 = por %p81, %p82
    %s84 = ssub.s32 %s15, %s27
    %p85 = scmp.eq.s32.totalorder %s84, 0
    %s87 = sadd.s32 %s86, 1
    %s88 = scalar_select %p85, %s86, %s87
    %p91 = pneg %p85
    %p92 = scmp.eq.s32.totalorder %s8, 3
    %p93 = por %p91, %p92
    %p94 = scmp.ne.s32.totalorder %s86, %s89
    %p95 = scmp.eq.s32.totalorder %s8, 0
    %p96 = por %p94, %p95
    %p97 = scmp.ne.s32.totalorder %s86, %s89
    %p98 = scmp.eq.s32.totalorder %s13, 3
    %p99 = por %p97, %p98
    %p100 = scmp.ne.s32.totalorder %s89, %s90
    %p101 = scmp.eq.s32.totalorder %s13, 0
    %p102 = por %p100, %p101
    %p103 = scmp.ne.s32.totalorder %s89, %s90
    %p104 = scmp.eq.s32.totalorder %s14, 3
    %p105 = por %p103, %p104
    %p107 = scmp.ne.s32.totalorder %s90, %s106
    %p108 = scmp.eq.s32.totalorder %s14, 0
    %p109 = por %p107, %p108
    %p110 = scmp.le.s32.totalorder 1, %s8
    %p111 = scmp.lt.s32.totalorder %s8, 5
    %p112 = pnand %p110, %p111
    %p113 = pneg %p112
    // Predicated region
    $region9: #{multi_scale_loss.5} parent=5 // pred_check
      _
    $region10: #{multi_scale_loss.5} parent=5 // pred_check_branch
      %115 = sbr.rel (%p112) target = $region12
    $region11: #{multi_scale_loss.5} parent=5 // pred_region
      %s116 = ssub.s32 %s8, 1
    $region12: #{multi_scale_loss.5} parent=5 // pred_fallthru
      _
    %p117 = scmp.lt.s32.totalorder %s8, 4
    // Predicated region
    $region13: #{multi_scale_loss.5} parent=5 // pred_check
      %p118 = pneg %p117
    $region14: #{multi_scale_loss.5} parent=5 // pred_check_branch
      %120 = sbr.rel (%p118) target = $region16
    $region15: #{multi_scale_loss.5} parent=5 // pred_region
      // Predicated region
      $region17: #{multi_scale_loss.5} parent=15 // pred_check
        %p121 = pneg %p42
      $region18: #{multi_scale_loss.5} parent=15 // pred_check_branch
        %123 = sbr.rel (%p121) target = $region20
      $region19: #{multi_scale_loss.5} parent=15 // pred_region
        %s124 = smul.u32 16, %s16
        %p125 = scmp.lt.s32.totalorder %s15, 1
        %s126 = scalar_select %p125, %s15, 1
        %p127 = scmp.lt.s32.totalorder %s124, 31
        %s128 = scalar_select %p127, %s124, 31
        %s129 = smul.addr %s126, 32
        %s130 = sadd.s32 %s128, %s129
        %s131 = smul.addr %s130, 8
        %s132 = scalar_lea.vmem %s0, %s131
        %s133 = smul.u32 16, %s16
      $region20: #{multi_scale_loss.5} parent=15 // pred_fallthru
        _
      // Predicated region
      $region21: #{multi_scale_loss.5} parent=15 // pred_check
        %p134 = pneg %p70
      $region22: #{multi_scale_loss.5} parent=15 // pred_check_branch
        %136 = sbr.rel (%p134) target = $region24
      $region23: #{multi_scale_loss.5} parent=15 // pred_region
        %s137 = smul.u32 16, %s16
        %p138 = scmp.lt.s32.totalorder %s15, 1
        %s139 = scalar_select %p138, %s15, 1
        %p140 = scmp.lt.s32.totalorder %s137, 31
        %s141 = scalar_select %p140, %s137, 31
        %s142 = smul.addr %s139, 32
        %s143 = sadd.s32 %s141, %s142
        %s144 = scalar_lea.vmem %s1, %s143
        %s145 = smul.u32 16, %s16
      $region24: #{multi_scale_loss.5} parent=15 // pred_fallthru
        _
    $region16: #{multi_scale_loss.5} parent=5 // pred_fallthru
      _
    %p146 = scmp.le.s32.totalorder 1, %s8
    %p147 = scmp.lt.s32.totalorder %s8, 5
    %p148 = pnand %p146, %p147
    %p149 = pneg %p148
    // Predicated region
    $region25: #{multi_scale_loss.5} parent=5 // pred_check
      _
    $region26: #{multi_scale_loss.5} parent=5 // pred_check_branch
      %151 = sbr.rel (%p148) target = $region28
    $region27: #{multi_scale_loss.5} parent=5 // pred_region
      %s152 = ssub.s32 %s8, 1
      %s153 = smul.u32 16, %s18
      %p154 = scmp.lt.s32.totalorder %s17, 1
      %s155 = scalar_select %p154, %s17, 1
      %p156 = scmp.lt.s32.totalorder %s153, 31
      %s157 = scalar_select %p156, %s153, 31
      %s158 = smul.addr %s155, 32
      %s159 = sadd.s32 %s157, %s158
      %s160 = smul.addr %s159, 8
      %s161 = scalar_lea.vmem %s0, %s160
      %p162 = pneg %p48
      %p163 = pneg %p45
      %s164 = smul.u32 16, %s18
      %p165 = scmp.lt.s32.totalorder %s17, 1
      %s166 = scalar_select %p165, %s17, 1
      %p167 = scmp.lt.s32.totalorder %s164, 31
      %s168 = scalar_select %p167, %s164, 31
      %s169 = smul.addr %s166, 32
      %s170 = sadd.s32 %s168, %s169
      %s171 = scalar_lea.vmem %s1, %s170
      %p172 = pneg %p76
      %p173 = pneg %p73
      %p174 = pneg %p102
      %p175 = pneg %p99
      %p176 = scmp.lt.s32.totalorder %s17, 1
      %s177 = scalar_select %p176, %s17, 1
      %s178 = scalar_lea.vmem %s2, %s177
      %s179 = smul.u32 16, %s18
      %p180 = scmp.lt.s32.totalorder %s17, 1
      %s181 = scalar_select %p180, %s17, 1
      %p182 = scmp.lt.s32.totalorder %s179, 31
      %s183 = scalar_select %p182, %s179, 31
      %s184 = smul.addr %s181, 32
      %s185 = sadd.s32 %s183, %s184
      %s186 = smul.addr %s185, 8
      %s187 = scalar_lea.vmem %s0, %s186
      %s188 = smul.u32 16, %s18
      %s189 = smul.u32 16, %s18
      %p190 = scmp.lt.s32.totalorder %s17, 1
      %s191 = scalar_select %p190, %s17, 1
      %p192 = scmp.lt.s32.totalorder %s189, 31
      %s193 = scalar_select %p192, %s189, 31
      %s194 = smul.addr %s191, 32
      %s195 = sadd.s32 %s193, %s194
      %s196 = scalar_lea.vmem %s1, %s195
      %s197 = smul.u32 16, %s18
      %p198 = scmp.lt.s32.totalorder %s17, 1
      %s199 = scalar_select %p198, %s17, 1
      %s200 = scalar_lea.vmem %s2, %s199
      %p201 = scmp.eq.s32.totalorder %s18, 0
      // Predicated region
      $region29: #{multi_scale_loss.5} parent=27 // pred_check
        %p202 = pneg %p201
      $region30: #{multi_scale_loss.5} parent=27 // pred_check_branch
        %204 = sbr.rel (%p202) target = $region32
      $region31: #{multi_scale_loss.5} parent=27 // pred_region
        %vm205 = vcmask 64512
        %206 = vst.msk [vmem:[#allocation2] sm:$0xff] %vm205, 0.0
        %vm207 = vcmask 0
        %208 = vst.msk [vmem:[#allocation3] sm:$0x1] %vm207, 0.0
      $region32: #{multi_scale_loss.5} parent=27 // pred_fallthru
        _
      %v209 = vld [vmem:[%s187] sm:$0xff]
      %v210 = vld [vmem:[%s187 + $0x8] sm:$0xff]
      %v211 = vld [vmem:[%s187 + $0x10] sm:$0xff]
      %v212 = vld [vmem:[%s187 + $0x18] sm:$0xff]
      %v213 = vld [vmem:[%s187 + $0x20] sm:$0xff]
      %v214 = vld [vmem:[%s187 + $0x28] sm:$0xff]
      %v215 = vld [vmem:[%s187 + $0x30] sm:$0xff]
      %v216 = vld [vmem:[%s187 + $0x38] sm:$0xff]
      %v217 = vld [vmem:[%s187 + $0x40] sm:$0xff]
      %v218 = vld [vmem:[%s187 + $0x48] sm:$0xff]
      %v219 = vld [vmem:[%s187 + $0x50] sm:$0xff]
      %v220 = vld [vmem:[%s187 + $0x58] sm:$0xff]
      %v221 = vld [vmem:[%s187 + $0x60] sm:$0xff]
      %v222 = vld [vmem:[%s187 + $0x68] sm:$0xff]
      %v223 = vld [vmem:[%s187 + $0x70] sm:$0xff]
      %v224 = vld [vmem:[%s187 + $0x78] sm:$0xff]
      %v225 = vld [vmem:[%s196] sm:$0xff]
      %v226 = vld [vmem:[%s196 + $0x8] sm:$0xff]
      %v227 = vld [vmem:[#allocation2] sm:$0xff]
      %228 = vmatprep.subr.mxu0 %v210
      %229 = vmatpush1.xpose.msra.mxu0 %v209
      %230 = vmatprep.subr.mxu0 0.0
      %231 = vmatpush1.xpose.msra.mxu0 0.0
      %232 = vmatprep.subr.mxu0 0.0
      %233 = vmatpush1.xpose.msra.mxu0 0.0
      %234 = vmatprep.subr.mxu0 0.0
      %235 = vmatpush1.xpose.msra.mxu0 0.0
      %236 = vmatprep.subr.mxu0 0.0
      %237 = vmatpush1.xpose.msra.mxu0 0.0
      %238 = vmatprep.subr.mxu0 0.0
      %239 = vmatpush1.xpose.msra.mxu0 0.0
      %240 = vmatprep.subr.mxu0 0.0
      %241 = vmatpush1.xpose.msra.mxu0 0.0
      %242 = vmatprep.subr.mxu0 0.0
      %243 = vmatpush1.xpose.msra.mxu0 0.0
      %244 = vmatprep.subr.mxu0 0.0
      %245 = vmatpush1.xpose.msra.mxu0 0.0
      %246 = vmatprep.subr.mxu0 0.0
      %247 = vmatpush1.xpose.msra.mxu0 0.0
      %248 = vmatprep.subr.mxu0 0.0
      %249 = vmatpush1.xpose.msra.mxu0 0.0
      %250 = vmatprep.subr.mxu0 0.0
      %251 = vmatpush1.xpose.msra.mxu0 0.0
      %252 = vmatprep.subr.mxu0 0.0
      %253 = vmatpush1.xpose.msra.mxu0 0.0
      %254 = vmatprep.subr.mxu0 0.0
      %255 = vmatpush1.xpose.msra.mxu0 0.0
      %256 = vmatprep.subr.mxu0 0.0
      %257 = vmatpush1.xpose.msra.mxu0 0.0
      %258 = vmatprep.subr.mxu0 0.0
      %259 = vmatpush1.xpose.msra.mxu0 0.0
      %260 = vmatprep.subr.mxu0 0.0
      %261 = vmatpush1.xpose.msra.mxu0 0.0
      %262 = vmatprep.subr.mxu0 0.0
      %263 = vmatpush1.xpose.msra.mxu0 0.0
      %264 = vmatprep.subr.mxu0 0.0
      %265 = vmatpush1.xpose.msra.mxu0 0.0
      %266 = vmatprep.subr.mxu0 0.0
      %267 = vmatpush1.xpose.msra.mxu0 0.0
      %268 = vmatprep.subr.mxu0 0.0
      %269 = vmatpush1.xpose.msra.mxu0 0.0
      %270 = vmatprep.subr.mxu0 0.0
      %271 = vmatpush1.xpose.msra.mxu0 0.0
      %272 = vmatprep.subr.mxu0 0.0
      %273 = vmatpush1.xpose.msra.mxu0 0.0
      %274 = vmatprep.subr.mxu0 0.0
      %275 = vmatpush1.xpose.msra.mxu0 0.0
      %276 = vmatprep.subr.mxu0 0.0
      %277 = vmatpush1.xpose.msra.mxu0 0.0
      %278 = vmatprep.subr.mxu0 0.0
      %279 = vmatpush1.xpose.msra.mxu0 0.0
      %280 = vmatprep.subr.mxu0 0.0
      %281 = vmatpush1.xpose.msra.mxu0 0.0
      %282 = vmatprep.subr.mxu0 0.0
      %283 = vmatpush1.xpose.msra.mxu0 0.0
      %284 = vmatprep.subr.mxu0 0.0
      %285 = vmatpush1.xpose.msra.mxu0 0.0
      %286 = vmatprep.subr.mxu0 0.0
      %287 = vmatpush1.xpose.msra.mxu0 0.0
      %288 = vmatprep.subr.mxu0 0.0
      %289 = vmatpush1.xpose.msra.mxu0 0.0
      %290 = vmatprep.subr.mxu0 0.0
      %291 = vmatpush1.xpose.msra.mxu0 0.0
      %292 = vmatprep.mubr.f32.mxu0 %v210
      %293 = vmatmul.mubr.f32.gmra.mrb[0].mxu0 %v209
      %v294 = vpop.f32.mrb[0].mxu0
      %v295 = vadd.f32 0.0, %v294
      %v296 = vpop.f32.mrb[0].mxu0
      %297 = vdwg.mxu0
      %298 = vmatprep.subr.mxu0 %v212
      %299 = vmatpush1.xpose.msra.mxu0 %v211
      %300 = vmatprep.subr.mxu0 0.0
      %301 = vmatpush1.xpose.msra.mxu0 0.0
      %302 = vmatprep.subr.mxu0 0.0
      %303 = vmatpush1.xpose.msra.mxu0 0.0
      %304 = vmatprep.subr.mxu0 0.0
      %305 = vmatpush1.xpose.msra.mxu0 0.0
      %306 = vmatprep.subr.mxu0 0.0
      %307 = vmatpush1.xpose.msra.mxu0 0.0
      %308 = vmatprep.subr.mxu0 0.0
      %309 = vmatpush1.xpose.msra.mxu0 0.0
      %310 = vmatprep.subr.mxu0 0.0
      %311 = vmatpush1.xpose.msra.mxu0 0.0
      %312 = vmatprep.subr.mxu0 0.0
      %313 = vmatpush1.xpose.msra.mxu0 0.0
      %314 = vmatprep.subr.mxu0 0.0
      %315 = vmatpush1.xpose.msra.mxu0 0.0
      %316 = vmatprep.subr.mxu0 0.0
      %317 = vmatpush1.xpose.msra.mxu0 0.0
      %318 = vmatprep.subr.mxu0 0.0
      %319 = vmatpush1.xpose.msra.mxu0 0.0
      %320 = vmatprep.subr.mxu0 0.0
      %321 = vmatpush1.xpose.msra.mxu0 0.0
      %322 = vmatprep.subr.mxu0 0.0
      %323 = vmatpush1.xpose.msra.mxu0 0.0
      %324 = vmatprep.subr.mxu0 0.0
      %325 = vmatpush1.xpose.msra.mxu0 0.0
      %326 = vmatprep.subr.mxu0 0.0
      %327 = vmatpush1.xpose.msra.mxu0 0.0
      %328 = vmatprep.subr.mxu0 0.0
      %329 = vmatpush1.xpose.msra.mxu0 0.0
      %330 = vmatprep.subr.mxu0 0.0
      %331 = vmatpush1.xpose.msra.mxu0 0.0
      %332 = vmatprep.subr.mxu0 0.0
      %333 = vmatpush1.xpose.msra.mxu0 0.0
      %334 = vmatprep.subr.mxu0 0.0
      %335 = vmatpush1.xpose.msra.mxu0 0.0
      %336 = vmatprep.subr.mxu0 0.0
      %337 = vmatpush1.xpose.msra.mxu0 0.0
      %338 = vmatprep.subr.mxu0 0.0
      %339 = vmatpush1.xpose.msra.mxu0 0.0
      %340 = vmatprep.subr.mxu0 0.0
      %341 = vmatpush1.xpose.msra.mxu0 0.0
      %342 = vmatprep.subr.mxu0 0.0
      %343 = vmatpush1.xpose.msra.mxu0 0.0
      %344 = vmatprep.subr.mxu0 0.0
      %345 = vmatpush1.xpose.msra.mxu0 0.0
      %346 = vmatprep.subr.mxu0 0.0
      %347 = vmatpush1.xpose.msra.mxu0 0.0
      %348 = vmatprep.subr.mxu0 0.0
      %349 = vmatpush1.xpose.msra.mxu0 0.0
      %350 = vmatprep.subr.mxu0 0.0
      %351 = vmatpush1.xpose.msra.mxu0 0.0
      %352 = vmatprep.subr.mxu0 0.0
      %353 = vmatpush1.xpose.msra.mxu0 0.0
      %354 = vmatprep.subr.mxu0 0.0
      %355 = vmatpush1.xpose.msra.mxu0 0.0
      %356 = vmatprep.subr.mxu0 0.0
      %357 = vmatpush1.xpose.msra.mxu0 0.0
      %358 = vmatprep.subr.mxu0 0.0
      %359 = vmatpush1.xpose.msra.mxu0 0.0
      %360 = vmatprep.subr.mxu0 0.0
      %361 = vmatpush1.xpose.msra.mxu0 0.0
      %362 = vmatprep.mubr.f32.mxu0 %v212
      %363 = vmatmul.mubr.f32.gmra.mrb[0].mxu0 %v211
      %v364 = vpop.f32.mrb[0].mxu0
      %v365 = vadd.f32 %v295, %v364
      %v366 = vpop.f32.mrb[0].mxu0
      %367 = vdwg.mxu0
      %368 = vmatprep.subr.mxu0 %v214
      %369 = vmatpush1.xpose.msra.mxu0 %v213
      %370 = vmatprep.subr.mxu0 0.0
      %371 = vmatpush1.xpose.msra.mxu0 0.0
      %372 = vmatprep.subr.mxu0 0.0
      %373 = vmatpush1.xpose.msra.mxu0 0.0
      %374 = vmatprep.subr.mxu0 0.0
      %375 = vmatpush1.xpose.msra.mxu0 0.0
      %376 = vmatprep.subr.mxu0 0.0
      %377 = vmatpush1.xpose.msra.mxu0 0.0
      %378 = vmatprep.subr.mxu0 0.0
      %379 = vmatpush1.xpose.msra.mxu0 0.0
      %380 = vmatprep.subr.mxu0 0.0
      %381 = vmatpush1.xpose.msra.mxu0 0.0
      %382 = vmatprep.subr.mxu0 0.0
      %383 = vmatpush1.xpose.msra.mxu0 0.0
      %384 = vmatprep.subr.mxu0 0.0
      %385 = vmatpush1.xpose.msra.mxu0 0.0
      %386 = vmatprep.subr.mxu0 0.0
      %387 = vmatpush1.xpose.msra.mxu0 0.0
      %388 = vmatprep.subr.mxu0 0.0
      %389 = vmatpush1.xpose.msra.mxu0 0.0
      %390 = vmatprep.subr.mxu0 0.0
      %391 = vmatpush1.xpose.msra.mxu0 0.0
      %392 = vmatprep.subr.mxu0 0.0
      %393 = vmatpush1.xpose.msra.mxu0 0.0
      %394 = vmatprep.subr.mxu0 0.0
      %395 = vmatpush1.xpose.msra.mxu0 0.0
      %396 = vmatprep.subr.mxu0 0.0
      %397 = vmatpush1.xpose.msra.mxu0 0.0
      %398 = vmatprep.subr.mxu0 0.0
      %399 = vmatpush1.xpose.msra.mxu0 0.0
      %400 = vmatprep.subr.mxu0 0.0
      %401 = vmatpush1.xpose.msra.mxu0 0.0
      %402 = vmatprep.subr.mxu0 0.0
      %403 = vmatpush1.xpose.msra.mxu0 0.0
      %404 = vmatprep.subr.mxu0 0.0
      %405 = vmatpush1.xpose.msra.mxu0 0.0
      %406 = vmatprep.subr.mxu0 0.0
      %407 = vmatpush1.xpose.msra.mxu0 0.0
      %408 = vmatprep.subr.mxu0 0.0
      %409 = vmatpush1.xpose.msra.mxu0 0.0
      %410 = vmatprep.subr.mxu0 0.0
      %411 = vmatpush1.xpose.msra.mxu0 0.0
      %412 = vmatprep.subr.mxu0 0.0
      %413 = vmatpush1.xpose.msra.mxu0 0.0
      %414 = vmatprep.subr.mxu0 0.0
      %415 = vmatpush1.xpose.msra.mxu0 0.0
      %416 = vmatprep.subr.mxu0 0.0
      %417 = vmatpush1.xpose.msra.mxu0 0.0
      %418 = vmatprep.subr.mxu0 0.0
      %419 = vmatpush1.xpose.msra.mxu0 0.0
      %420 = vmatprep.subr.mxu0 0.0
      %421 = vmatpush1.xpose.msra.mxu0 0.0
      %422 = vmatprep.subr.mxu0 0.0
      %423 = vmatpush1.xpose.msra.mxu0 0.0
      %424 = vmatprep.subr.mxu0 0.0
      %425 = vmatpush1.xpose.msra.mxu0 0.0
      %426 = vmatprep.subr.mxu0 0.0
      %427 = vmatpush1.xpose.msra.mxu0 0.0
      %428 = vmatprep.subr.mxu0 0.0
      %429 = vmatpush1.xpose.msra.mxu0 0.0
      %430 = vmatprep.subr.mxu0 0.0
      %431 = vmatpush1.xpose.msra.mxu0 0.0
      %432 = vmatprep.mubr.f32.mxu0 %v214
      %433 = vmatmul.mubr.f32.gmra.mrb[0].mxu0 %v213
      %v434 = vpop.f32.mrb[0].mxu0
      %v435 = vadd.f32 %v365, %v434
      %v436 = vpop.f32.mrb[0].mxu0
      %437 = vdwg.mxu0
      %438 = vmatprep.subr.mxu0 %v216
      %439 = vmatpush1.xpose.msra.mxu0 %v215
      %440 = vmatprep.subr.mxu0 0.0
      %441 = vmatpush1.xpose.msra.mxu0 0.0
      %442 = vmatprep.subr.mxu0 0.0
      %443 = vmatpush1.xpose.msra.mxu0 0.0
      %444 = vmatprep.subr.mxu0 0.0
      %445 = vmatpush1.xpose.msra.mxu0 0.0
      %446 = vmatprep.subr.mxu0 0.0
      %447 = vmatpush1.xpose.msra.mxu0 0.0
      %448 = vmatprep.subr.mxu0 0.0
      %449 = vmatpush1.xpose.msra.mxu0 0.0
      %450 = vmatprep.subr.mxu0 0.0
      %451 = vmatpush1.xpose.msra.mxu0 0.0
      %452 = vmatprep.subr.mxu0 0.0
      %453 = vmatpush1.xpose.msra.mxu0 0.0
      %454 = vmatprep.subr.mxu0 0.0
      %455 = vmatpush1.xpose.msra.mxu0 0.0
      %456 = vmatprep.subr.mxu0 0.0
      %457 = vmatpush1.xpose.msra.mxu0 0.0
      %458 = vmatprep.subr.mxu0 0.0
      %459 = vmatpush1.xpose.msra.mxu0 0.0
      %460 = vmatprep.subr.mxu0 0.0
      %461 = vmatpush1.xpose.msra.mxu0 0.0
      %462 = vmatprep.subr.mxu0 0.0
      %463 = vmatpush1.xpose.msra.mxu0 0.0
      %464 = vmatprep.subr.mxu0 0.0
      %465 = vmatpush1.xpose.msra.mxu0 0.0
      %466 = vmatprep.subr.mxu0 0.0
      %467 = vmatpush1.xpose.msra.mxu0 0.0
      %468 = vmatprep.subr.mxu0 0.0
      %469 = vmatpush1.xpose.msra.mxu0 0.0
      %470 = vmatprep.subr.mxu0 0.0
      %471 = vmatpush1.xpose.msra.mxu0 0.0
      %472 = vmatprep.subr.mxu0 0.0
      %473 = vmatpush1.xpose.msra.mxu0 0.0
      %474 = vmatprep.subr.mxu0 0.0
      %475 = vmatpush1.xpose.msra.mxu0 0.0
      %476 = vmatprep.subr.mxu0 0.0
      %477 = vmatpush1.xpose.msra.mxu0 0.0
      %478 = vmatprep.subr.mxu0 0.0
      %479 = vmatpush1.xpose.msra.mxu0 0.0
      %480 = vmatprep.subr.mxu0 0.0
      %481 = vmatpush1.xpose.msra.mxu0 0.0
      %482 = vmatprep.subr.mxu0 0.0
      %483 = vmatpush1.xpose.msra.mxu0 0.0
      %484 = vmatprep.subr.mxu0 0.0
      %485 = vmatpush1.xpose.msra.mxu0 0.0
      %486 = vmatprep.subr.mxu0 0.0
      %487 = vmatpush1.xpose.msra.mxu0 0.0
      %488 = vmatprep.subr.mxu0 0.0
      %489 = vmatpush1.xpose.msra.mxu0 0.0
      %490 = vmatprep.subr.mxu0 0.0
      %491 = vmatpush1.xpose.msra.mxu0 0.0
      %492 = vmatprep.subr.mxu0 0.0
      %493 = vmatpush1.xpose.msra.mxu0 0.0
      %494 = vmatprep.subr.mxu0 0.0
      %495 = vmatpush1.xpose.msra.mxu0 0.0
      %496 = vmatprep.subr.mxu0 0.0
      %497 = vmatpush1.xpose.msra.mxu0 0.0
      %498 = vmatprep.subr.mxu0 0.0
      %499 = vmatpush1.xpose.msra.mxu0 0.0
      %500 = vmatprep.subr.mxu0 0.0
      %501 = vmatpush1.xpose.msra.mxu0 0.0
      %502 = vmatprep.mubr.f32.mxu0 %v216
      %503 = vmatmul.mubr.f32.gmra.mrb[0].mxu0 %v215
      %v504 = vpop.f32.mrb[0].mxu0
      %v505 = vadd.f32 %v435, %v504
      %v506 = vpop.f32.mrb[0].mxu0
      %507 = vdwg.mxu0
      %508 = vmatprep.subr.mxu0 %v218
      %509 = vmatpush1.xpose.msra.mxu0 %v217
      %510 = vmatprep.subr.mxu0 0.0
      %511 = vmatpush1.xpose.msra.mxu0 0.0
      %512 = vmatprep.subr.mxu0 0.0
      %513 = vmatpush1.xpose.msra.mxu0 0.0
      %514 = vmatprep.subr.mxu0 0.0
      %515 = vmatpush1.xpose.msra.mxu0 0.0
      %516 = vmatprep.subr.mxu0 0.0
      %517 = vmatpush1.xpose.msra.mxu0 0.0
      %518 = vmatprep.subr.mxu0 0.0
      %519 = vmatpush1.xpose.msra.mxu0 0.0
      %520 = vmatprep.subr.mxu0 0.0
      %521 = vmatpush1.xpose.msra.mxu0 0.0
      %522 = vmatprep.subr.mxu0 0.0
      %523 = vmatpush1.xpose.msra.mxu0 0.0
      %524 = vmatprep.subr.mxu0 0.0
      %525 = vmatpush1.xpose.msra.mxu0 0.0
      %526 = vmatprep.subr.mxu0 0.0
      %527 = vmatpush1.xpose.msra.mxu0 0.0
      %528 = vmatprep.subr.mxu0 0.0
      %529 = vmatpush1.xpose.msra.mxu0 0.0
      %530 = vmatprep.subr.mxu0 0.0
      %531 = vmatpush1.xpose.msra.mxu0 0.0
      %532 = vmatprep.subr.mxu0 0.0
      %533 = vmatpush1.xpose.msra.mxu0 0.0
      %534 = vmatprep.subr.mxu0 0.0
      %535 = vmatpush1.xpose.msra.mxu0 0.0
      %536 = vmatprep.subr.mxu0 0.0
      %537 = vmatpush1.xpose.msra.mxu0 0.0
      %538 = vmatprep.subr.mxu0 0.0
      %539 = vmatpush1.xpose.msra.mxu0 0.0
      %540 = vmatprep.subr.mxu0 0.0
      %541 = vmatpush1.xpose.msra.mxu0 0.0
      %542 = vmatprep.subr.mxu0 0.0
      %543 = vmatpush1.xpose.msra.mxu0 0.0
      %544 = vmatprep.subr.mxu0 0.0
      %545 = vmatpush1.xpose.msra.mxu0 0.0
      %546 = vmatprep.subr.mxu0 0.0
      %547 = vmatpush1.xpose.msra.mxu0 0.0
      %548 = vmatprep.subr.mxu0 0.0
      %549 = vmatpush1.xpose.msra.mxu0 0.0
      %550 = vmatprep.subr.mxu0 0.0
      %551 = vmatpush1.xpose.msra.mxu0 0.0
      %552 = vmatprep.subr.mxu0 0.0
      %553 = vmatpush1.xpose.msra.mxu0 0.0
      %554 = vmatprep.subr.mxu0 0.0
      %555 = vmatpush1.xpose.msra.mxu0 0.0
      %556 = vmatprep.subr.mxu0 0.0
      %557 = vmatpush1.xpose.msra.mxu0 0.0
      %558 = vmatprep.subr.mxu0 0.0
      %559 = vmatpush1.xpose.msra.mxu0 0.0
      %560 = vmatprep.subr.mxu0 0.0
      %561 = vmatpush1.xpose.msra.mxu0 0.0
      %562 = vmatprep.subr.mxu0 0.0
      %563 = vmatpush1.xpose.msra.mxu0 0.0
      %564 = vmatprep.subr.mxu0 0.0
      %565 = vmatpush1.xpose.msra.mxu0 0.0
      %566 = vmatprep.subr.mxu0 0.0
      %567 = vmatpush1.xpose.msra.mxu0 0.0
      %568 = vmatprep.subr.mxu0 0.0
      %569 = vmatpush1.xpose.msra.mxu0 0.0
      %570 = vmatprep.subr.mxu0 0.0
      %571 = vmatpush1.xpose.msra.mxu0 0.0
      %572 = vmatprep.mubr.f32.mxu0 %v218
      %573 = vmatmul.mubr.f32.gmra.mrb[0].mxu0 %v217
      %v574 = vpop.f32.mrb[0].mxu0
      %v575 = vadd.f32 %v505, %v574
      %v576 = vpop.f32.mrb[0].mxu0
      %577 = vdwg.mxu0
      %578 = vmatprep.subr.mxu0 %v220
      %579 = vmatpush1.xpose.msra.mxu0 %v219
      %580 = vmatprep.subr.mxu0 0.0
      %581 = vmatpush1.xpose.msra.mxu0 0.0
      %582 = vmatprep.subr.mxu0 0.0
      %583 = vmatpush1.xpose.msra.mxu0 0.0
      %584 = vmatprep.subr.mxu0 0.0
      %585 = vmatpush1.xpose.msra.mxu0 0.0
      %586 = vmatprep.subr.mxu0 0.0
      %587 = vmatpush1.xpose.msra.mxu0 0.0
      %588 = vmatprep.subr.mxu0 0.0
      %589 = vmatpush1.xpose.msra.mxu0 0.0
      %590 = vmatprep.subr.mxu0 0.0
      %591 = vmatpush1.xpose.msra.mxu0 0.0
      %592 = vmatprep.subr.mxu0 0.0
      %593 = vmatpush1.xpose.msra.mxu0 0.0
      %594 = vmatprep.subr.mxu0 0.0
      %595 = vmatpush1.xpose.msra.mxu0 0.0
      %596 = vmatprep.subr.mxu0 0.0
      %597 = vmatpush1.xpose.msra.mxu0 0.0
      %598 = vmatprep.subr.mxu0 0.0
      %599 = vmatpush1.xpose.msra.mxu0 0.0
      %600 = vmatprep.subr.mxu0 0.0
      %601 = vmatpush1.xpose.msra.mxu0 0.0
      %602 = vmatprep.subr.mxu0 0.0
      %603 = vmatpush1.xpose.msra.mxu0 0.0
      %604 = vmatprep.subr.mxu0 0.0
      %605 = vmatpush1.xpose.msra.mxu0 0.0
      %606 = vmatprep.subr.mxu0 0.0
      %607 = vmatpush1.xpose.msra.mxu0 0.0
      %608 = vmatprep.subr.mxu0 0.0
      %609 = vmatpush1.xpose.msra.mxu0 0.0
      %610 = vmatprep.subr.mxu0 0.0
      %611 = vmatpush1.xpose.msra.mxu0 0.0
      %612 = vmatprep.subr.mxu0 0.0
      %613 = vmatpush1.xpose.msra.mxu0 0.0
      %614 = vmatprep.subr.mxu0 0.0
      %615 = vmatpush1.xpose.msra.mxu0 0.0
      %616 = vmatprep.subr.mxu0 0.0
      %617 = vmatpush1.xpose.msra.mxu0 0.0
      %618 = vmatprep.subr.mxu0 0.0
      %619 = vmatpush1.xpose.msra.mxu0 0.0
      %620 = vmatprep.subr.mxu0 0.0
      %621 = vmatpush1.xpose.msra.mxu0 0.0
      %622 = vmatprep.subr.mxu0 0.0
      %623 = vmatpush1.xpose.msra.mxu0 0.0
      %624 = vmatprep.subr.mxu0 0.0
      %625 = vmatpush1.xpose.msra.mxu0 0.0
      %626 = vmatprep.subr.mxu0 0.0
      %627 = vmatpush1.xpose.msra.mxu0 0.0
      %628 = vmatprep.subr.mxu0 0.0
      %629 = vmatpush1.xpose.msra.mxu0 0.0
      %630 = vmatprep.subr.mxu0 0.0
      %631 = vmatpush1.xpose.msra.mxu0 0.0
      %632 = vmatprep.subr.mxu0 0.0
      %633 = vmatpush1.xpose.msra.mxu0 0.0
      %634 = vmatprep.subr.mxu0 0.0
      %635 = vmatpush1.xpose.msra.mxu0 0.0
      %636 = vmatprep.subr.mxu0 0.0
      %637 = vmatpush1.xpose.msra.mxu0 0.0
      %638 = vmatprep.subr.mxu0 0.0
      %639 = vmatpush1.xpose.msra.mxu0 0.0
      %640 = vmatprep.subr.mxu0 0.0
      %641 = vmatpush1.xpose.msra.mxu0 0.0
      %642 = vmatprep.mubr.f32.mxu0 %v220
      %643 = vmatmul.mubr.f32.gmra.mrb[0].mxu0 %v219
      %v644 = vpop.f32.mrb[0].mxu0
      %v645 = vadd.f32 %v575, %v644
      %v646 = vpop.f32.mrb[0].mxu0
      %647 = vdwg.mxu0
      %648 = vmatprep.subr.mxu0 %v222
      %649 = vmatpush1.xpose.msra.mxu0 %v221
      %650 = vmatprep.subr.mxu0 0.0
      %651 = vmatpush1.xpose.msra.mxu0 0.0
      %652 = vmatprep.subr.mxu0 0.0
      %653 = vmatpush1.xpose.msra.mxu0 0.0
      %654 = vmatprep.subr.mxu0 0.0
      %655 = vmatpush1.xpose.msra.mxu0 0.0
      %656 = vmatprep.subr.mxu0 0.0
      %657 = vmatpush1.xpose.msra.mxu0 0.0
      %658 = vmatprep.subr.mxu0 0.0
      %659 = vmatpush1.xpose.msra.mxu0 0.0
      %660 = vmatprep.subr.mxu0 0.0
      %661 = vmatpush1.xpose.msra.mxu0 0.0
      %662 = vmatprep.subr.mxu0 0.0
      %663 = vmatpush1.xpose.msra.mxu0 0.0
      %664 = vmatprep.subr.mxu0 0.0
      %665 = vmatpush1.xpose.msra.mxu0 0.0
      %666 = vmatprep.subr.mxu0 0.0
      %667 = vmatpush1.xpose.msra.mxu0 0.0
      %668 = vmatprep.subr.mxu0 0.0
      %669 = vmatpush1.xpose.msra.mxu0 0.0
      %670 = vmatprep.subr.mxu0 0.0
      %671 = vmatpush1.xpose.msra.mxu0 0.0
      %672 = vmatprep.subr.mxu0 0.0
      %673 = vmatpush1.xpose.msra.mxu0 0.0
      %674 = vmatprep.subr.mxu0 0.0
      %675 = vmatpush1.xpose.msra.mxu0 0.0
      %676 = vmatprep.subr.mxu0 0.0
      %677 = vmatpush1.xpose.msra.mxu0 0.0
      %678 = vmatprep.subr.mxu0 0.0
      %679 = vmatpush1.xpose.msra.mxu0 0.0
      %680 = vmatprep.subr.mxu0 0.0
      %681 = vmatpush1.xpose.msra.mxu0 0.0
      %682 = vmatprep.subr.mxu0 0.0
      %683 = vmatpush1.xpose.msra.mxu0 0.0
      %684 = vmatprep.subr.mxu0 0.0
      %685 = vmatpush1.xpose.msra.mxu0 0.0
      %686 = vmatprep.subr.mxu0 0.0
      %687 = vmatpush1.xpose.msra.mxu0 0.0
      %688 = vmatprep.subr.mxu0 0.0
      %689 = vmatpush1.xpose.msra.mxu0 0.0
      %690 = vmatprep.subr.mxu0 0.0
      %691 = vmatpush1.xpose.msra.mxu0 0.0
      %692 = vmatprep.subr.mxu0 0.0
      %693 = vmatpush1.xpose.msra.mxu0 0.0
      %694 = vmatprep.subr.mxu0 0.0
      %695 = vmatpush1.xpose.msra.mxu0 0.0
      %696 = vmatprep.subr.mxu0 0.0
      %697 = vmatpush1.xpose.msra.mxu0 0.0
      %698 = vmatprep.subr.mxu0 0.0
      %699 = vmatpush1.xpose.msra.mxu0 0.0
      %700 = vmatprep.subr.mxu0 0.0
      %701 = vmatpush1.xpose.msra.mxu0 0.0
      %702 = vmatprep.subr.mxu0 0.0
      %703 = vmatpush1.xpose.msra.mxu0 0.0
      %704 = vmatprep.subr.mxu0 0.0
      %705 = vmatpush1.xpose.msra.mxu0 0.0
      %706 = vmatprep.subr.mxu0 0.0
      %707 = vmatpush1.xpose.msra.mxu0 0.0
      %708 = vmatprep.subr.mxu0 0.0
      %709 = vmatpush1.xpose.msra.mxu0 0.0
      %710 = vmatprep.subr.mxu0 0.0
      %711 = vmatpush1.xpose.msra.mxu0 0.0
      %712 = vmatprep.mubr.f32.mxu0 %v222
      %713 = vmatmul.mubr.f32.gmra.mrb[0].mxu0 %v221
      %v714 = vpop.f32.mrb[0].mxu0
      %v715 = vadd.f32 %v645, %v714
      %v716 = vpop.f32.mrb[0].mxu0
      %717 = vdwg.mxu0
      %718 = vmatprep.subr.mxu0 %v224
      %719 = vmatpush1.xpose.msra.mxu0 %v223
      %720 = vmatprep.subr.mxu0 0.0
      %721 = vmatpush1.xpose.msra.mxu0 0.0
      %722 = vmatprep.subr.mxu0 0.0
      %723 = vmatpush1.xpose.msra.mxu0 0.0
      %724 = vmatprep.subr.mxu0 0.0
      %725 = vmatpush1.xpose.msra.mxu0 0.0
      %726 = vmatprep.subr.mxu0 0.0
      %727 = vmatpush1.xpose.msra.mxu0 0.0
      %728 = vmatprep.subr.mxu0 0.0
      %729 = vmatpush1.xpose.msra.mxu0 0.0
      %730 = vmatprep.subr.mxu0 0.0
      %731 = vmatpush1.xpose.msra.mxu0 0.0
      %732 = vmatprep.subr.mxu0 0.0
      %733 = vmatpush1.xpose.msra.mxu0 0.0
      %734 = vmatprep.subr.mxu0 0.0
      %735 = vmatpush1.xpose.msra.mxu0 0.0
      %736 = vmatprep.subr.mxu0 0.0
      %737 = vmatpush1.xpose.msra.mxu0 0.0
      %738 = vmatprep.subr.mxu0 0.0
      %739 = vmatpush1.xpose.msra.mxu0 0.0
      %740 = vmatprep.subr.mxu0 0.0
      %741 = vmatpush1.xpose.msra.mxu0 0.0
      %742 = vmatprep.subr.mxu0 0.0
      %743 = vmatpush1.xpose.msra.mxu0 0.0
      %744 = vmatprep.subr.mxu0 0.0
      %745 = vmatpush1.xpose.msra.mxu0 0.0
      %746 = vmatprep.subr.mxu0 0.0
      %747 = vmatpush1.xpose.msra.mxu0 0.0
      %748 = vmatprep.subr.mxu0 0.0
      %749 = vmatpush1.xpose.msra.mxu0 0.0
      %750 = vmatprep.subr.mxu0 0.0
      %751 = vmatpush1.xpose.msra.mxu0 0.0
      %752 = vmatprep.subr.mxu0 0.0
      %753 = vmatpush1.xpose.msra.mxu0 0.0
      %754 = vmatprep.subr.mxu0 0.0
      %755 = vmatpush1.xpose.msra.mxu0 0.0
      %756 = vmatprep.subr.mxu0 0.0
      %757 = vmatpush1.xpose.msra.mxu0 0.0
      %758 = vmatprep.subr.mxu0 0.0
      %759 = vmatpush1.xpose.msra.mxu0 0.0
      %760 = vmatprep.subr.mxu0 0.0
      %761 = vmatpush1.xpose.msra.mxu0 0.0
      %762 = vmatprep.subr.mxu0 0.0
      %763 = vmatpush1.xpose.msra.mxu0 0.0
      %764 = vmatprep.subr.mxu0 0.0
      %765 = vmatpush1.xpose.msra.mxu0 0.0
      %766 = vmatprep.subr.mxu0 0.0
      %767 = vmatpush1.xpose.msra.mxu0 0.0
      %768 = vmatprep.subr.mxu0 0.0
      %769 = vmatpush1.xpose.msra.mxu0 0.0
      %770 = vmatprep.subr.mxu0 0.0
      %771 = vmatpush1.xpose.msra.mxu0 0.0
      %772 = vmatprep.subr.mxu0 0.0
      %773 = vmatpush1.xpose.msra.mxu0 0.0
      %774 = vmatprep.subr.mxu0 0.0
      %775 = vmatpush1.xpose.msra.mxu0 0.0
      %776 = vmatprep.subr.mxu0 0.0
      %777 = vmatpush1.xpose.msra.mxu0 0.0
      %778 = vmatprep.subr.mxu0 0.0
      %779 = vmatpush1.xpose.msra.mxu0 0.0
      %780 = vmatprep.subr.mxu0 0.0
      %781 = vmatpush1.xpose.msra.mxu0 0.0
      %782 = vmatprep.mubr.f32.mxu0 %v224
      %783 = vmatmul.mubr.f32.gmra.mrb[0].mxu0 %v223
      %v784 = vpop.f32.mrb[0].mxu0
      %v785 = vadd.f32 %v715, %v784
      %v786 = vpop.f32.mrb[0].mxu0
      %787 = vdwg.mxu0
      %v788 = vadd.f32 %v227, %v785
      %vm789 = vcmask 64512
      %790 = vst.msk [vmem:[#allocation2] sm:$0xff] %vm789, %v788
      %v791 = vld [vmem:[#allocation3] sm:$0x1]
      %v792 = vmul.f32 %v225, %v225
      %v793 = vmul.f32 %v226, %v226
      %v796 = vlaneseq
      %v797 = vshrl.u32 %v796, 7
      %v798 = vsub.s32 0, %v797
      %v799 = vrot.slane %v792, %v798
      %v800 = vlaneseq
      %v801 = vshrl.u32 %v800, 7
      %v802 = vsub.s32 1, %v801
      %v803 = vrot.slane %v792, %v802
      %v804 = vlaneseq
      %v805 = vshrl.u32 %v804, 7
      %v806 = vsub.s32 2, %v805
      %v807 = vrot.slane %v792, %v806
      %v808 = vlaneseq
      %v809 = vshrl.u32 %v808, 7
      %v810 = vsub.s32 3, %v809
      %v811 = vrot.slane %v792, %v810
      %v812 = vlaneseq
      %v813 = vshrl.u32 %v812, 7
      %v814 = vsub.s32 4, %v813
      %v815 = vrot.slane %v792, %v814
      %v816 = vlaneseq
      %v817 = vshrl.u32 %v816, 7
      %v818 = vsub.s32 5, %v817
      %v819 = vrot.slane %v792, %v818
      %v820 = vlaneseq
      %v821 = vshrl.u32 %v820, 7
      %v822 = vsub.s32 6, %v821
      %v823 = vrot.slane %v792, %v822
      %v824 = vlaneseq
      %v825 = vshrl.u32 %v824, 7
      %v826 = vsub.s32 7, %v825
      %v827 = vrot.slane %v792, %v826
      %v828 = vlaneseq
      %v829 = vshrl.u32 %v828, 7
      %v830 = vsub.s32 0, %v829
      %v831 = vrot.slane %v793, %v830
      %v832 = vlaneseq
      %v833 = vshrl.u32 %v832, 7
      %v834 = vsub.s32 1, %v833
      %v835 = vrot.slane %v793, %v834
      %v836 = vlaneseq
      %v837 = vshrl.u32 %v836, 7
      %v838 = vsub.s32 2, %v837
      %v839 = vrot.slane %v793, %v838
      %v840 = vlaneseq
      %v841 = vshrl.u32 %v840, 7
      %v842 = vsub.s32 3, %v841
      %v843 = vrot.slane %v793, %v842
      %v844 = vlaneseq
      %v845 = vshrl.u32 %v844, 7
      %v846 = vsub.s32 4, %v845
      %v847 = vrot.slane %v793, %v846
      %v848 = vlaneseq
      %v849 = vshrl.u32 %v848, 7
      %v850 = vsub.s32 5, %v849
      %v851 = vrot.slane %v793, %v850
      %v852 = vlaneseq
      %v853 = vshrl.u32 %v852, 7
      %v854 = vsub.s32 6, %v853
      %v855 = vrot.slane %v793, %v854
      %v856 = vlaneseq
      %v857 = vshrl.u32 %v856, 7
      %v858 = vsub.s32 7, %v857
      %v859 = vrot.slane %v793, %v858
      %vm876 = vcmask 1040384
      %v877 = vsel %vm876, %v799, 0.0
      %v878 = vsel %vm876, %v803, 0.0
      %v879 = vadd.f32 %v877, %v878
      %v880 = vsel %vm876, %v807, 0.0
      %v881 = vadd.f32 %v879, %v880
      %v882 = vsel %vm876, %v811, 0.0
      %v883 = vadd.f32 %v881, %v882
      %v884 = vsel %vm876, %v815, 0.0
      %v885 = vadd.f32 %v883, %v884
      %v886 = vsel %vm876, %v819, 0.0
      %v887 = vadd.f32 %v885, %v886
      %v888 = vsel %vm876, %v823, 0.0
      %v889 = vadd.f32 %v887, %v888
      %v890 = vsel %vm876, %v827, 0.0
      %v891 = vadd.f32 %v889, %v890
      %v892 = vsel %vm876, %v831, 0.0
      %v893 = vadd.f32 %v891, %v892
      %v894 = vsel %vm876, %v835, 0.0
      %v895 = vadd.f32 %v893, %v894
      %v896 = vsel %vm876, %v839, 0.0
      %v897 = vadd.f32 %v895, %v896
      %v898 = vsel %vm876, %v843, 0.0
      %v899 = vadd.f32 %v897, %v898
      %v900 = vsel %vm876, %v847, 0.0
      %v901 = vadd.f32 %v899, %v900
      %v902 = vsel %vm876, %v851, 0.0
      %v903 = vadd.f32 %v901, %v902
      %v904 = vsel %vm876, %v855, 0.0
      %v905 = vadd.f32 %v903, %v904
      %v906 = vsel %vm876, %v859, 0.0
      %v907 = vadd.f32 %v905, %v906
      %908 = vadd.xlane.f32.xlu0 %v907
      %v909 = vpop.xlane.xlu0 %908
      %v910 = vrot.slane %v909, 4
      %v911 = vadd.f32 %v909, %v910
      %v912 = vrot.slane %v911, 2
      %v913 = vadd.f32 %v911, %v912
      %v914 = vrot.slane %v913, 1
      %v915 = vadd.f32 %v913, %v914
      %s916 = vtos %v915
      %v917 = vstv %s916
      %v918 = vadd.f32 %v791, %v917
      %vm919 = vcmask 0
      %920 = vst.msk [vmem:[#allocation3] sm:$0x1] %vm919, %v918
      %p921 = scmp.eq.s32.totalorder %s18, 1
      // Predicated region
      $region33: #{multi_scale_loss.5} parent=27 // pred_check
        %p922 = pneg %p921
      $region34: #{multi_scale_loss.5} parent=27 // pred_check_branch
        %924 = sbr.rel (%p922) target = $region36
      $region35: #{multi_scale_loss.5} parent=27 // pred_region
        %v925 = vld [vmem:[#allocation2] sm:$0xff]
        %v926 = vmul.f32 %v925, 0.00024414063
        %v927 = vld [vmem:[#allocation3] sm:$0x1]
        %v928 = vmul.f32 %v927, 0.00024414063
        %v930 = vlaneseq
        %v931 = vshrl.u32 %v930, 7
        %v932 = vsub.s32 0, %v931
        %v933 = vrot.slane %v928, %v932
        %934 = vset.pattern.permute.xlu0 0
        %935 = vperm.xlu0 %934, %v933
        %v936 = vpop.permute.xlu0 %935
        %v938 = vsub.f32 %v926, %v936
        %v939 = vmul.f32 %v938, %v938
        %v940 = vsel %vm789, %v939, 0.0
        %941 = vadd.xlane.f32.xlu0 %v940
        %v942 = vpop.xlane.xlu0 %941
        %v943 = vrot.slane %v942, 4
        %v944 = vadd.f32 %v942, %v943
        %v945 = vrot.slane %v944, 2
        %v946 = vadd.f32 %v944, %v945
        %v947 = vrot.slane %v946, 1
        %v948 = vadd.f32 %v946, %v947
        %s949 = vtos %v948
        %v950 = vstv %s949
        %951 = vst.msk [vmem:[%s200] sm:$0x1] %vm919, %v950
      $region36: #{multi_scale_loss.5} parent=27 // pred_fallthru
        _
      %p952 = scmp.lt.s32.totalorder %s17, 1
      %s953 = scalar_select %p952, %s17, 1
      %s954 = scalar_lea.vmem %s2, %s953
      // Predicated region
      $region37: #{multi_scale_loss.5} parent=27 // pred_check
        %p955 = pneg %p99
      $region38: #{multi_scale_loss.5} parent=27 // pred_check_branch
        %957 = sbr.rel (%p955) target = $region40
      $region39: #{multi_scale_loss.5} parent=27 // pred_region
        _
      $region40: #{multi_scale_loss.5} parent=27 // pred_fallthru
        _
    $region28: #{multi_scale_loss.5} parent=5 // pred_fallthru
      _
    %p958 = scmp.le.s32.totalorder 2, %s8
    // Predicated region
    $region41: #{multi_scale_loss.5} parent=5 // pred_check
      %p959 = pneg %p958
    $region42: #{multi_scale_loss.5} parent=5 // pred_check_branch
      %961 = sbr.rel (%p959) target = $region44
    $region43: #{multi_scale_loss.5} parent=5 // pred_region
      %s962 = ssub.s32 %s8, 2
      // Predicated region
      $region45: #{multi_scale_loss.5} parent=43 // pred_check
        %p963 = pneg %p105
      $region46: #{multi_scale_loss.5} parent=43 // pred_check_branch
        %965 = sbr.rel (%p963) target = $region48
      $region47: #{multi_scale_loss.5} parent=43 // pred_region
        %p966 = scmp.lt.s32.totalorder %s19, 1
        %s967 = scalar_select %p966, %s19, 1
        %s968 = scalar_lea.vmem %s2, %s967
      $region48: #{multi_scale_loss.5} parent=43 // pred_fallthru
        _
    $region44: #{multi_scale_loss.5} parent=5 // pred_fallthru
      _
  $region6: #{multi_scale_loss.5} parent=0 // loop_footer
    %s12 = sadd.s32 1, %s8
  $region7: #{multi_scale_loss.5} parent=0 // loop_footer_branch
    %7 = sbr.rel target = $region3
  $region8: #{multi_scale_loss.5} parent=0 // loop_exit
    _

// kernel: multi_scale_loss.7
$region0: #{multi_scale_loss.7}
  #allocation0 [shape = 'u32[]', space=smem, size = 0x4, offset = 0x4, fixed_abs, tag = 'smem constant byte address 0x4 - core index']
  #allocation1 [shape = 'u32[144,128]{1,0:T(1,128)}', space=vmem, size = 0x12000, scoped, tag = 'internal scratch']
  #allocation2 [shape = 'f32[32,32]{1,0:T(8,128)}', space=vmem, size = 0x4000, scoped, tag = 'scratch operand']
  #allocation3 [shape = 'f32[1,1]{1,0:T(1,128)}', space=vmem, size = 0x200, scoped, tag = 'scratch operand']
  %s0 = inlined_call_operand.vmem [shape: f32[2,32,64], index: 0, kind: input, shape index: {}]
  %s1 = inlined_call_operand.vmem [shape: f32[2,1,64], index: 1, kind: input, shape index: {}]
  %s2 = inlined_call_operand.vmem [shape: f32[2,1,1], index: 2, kind: output, shape index: {}]
  %s3 = sld [smem:[#allocation0]]
  $region49: #{multi_scale_loss.7} parent=0
    _
  %s5 = ssub.s32 1, %s3
  %s6 = scalar_select 0, %s5, %s3
  loop: start=0, step=1, limit=4
  $region2: #{multi_scale_loss.7} parent=0 // loop_pre_header
    _
  $region3: #{multi_scale_loss.7} parent=0 // loop_header
    %s8 = sphi 0, %s12
    %p9 = scmp.ge.s32.totalorder %s8, 4
    %s15 = sphi 0, %s27
    %s16 = sphi 0, %s23
    %s17 = sphi 0, %s15
    %s18 = sphi 0, %s16
    %s19 = sphi 0, %s17
    %s20 = sphi 0, %s18
    %s32 = sphi 0, %s34
    %s35 = sphi 0, %s32
    %s36 = sphi 0, %s35
    %s52 = sphi 0, %s36
    %s60 = sphi 0, %s62
    %s63 = sphi 0, %s60
    %s64 = sphi 0, %s63
    %s80 = sphi 0, %s64
    %s86 = sphi 0, %s88
    %s89 = sphi 0, %s86
    %s90 = sphi 0, %s89
    %s106 = sphi 0, %s90
  $region4: #{multi_scale_loss.7} parent=0 // loop_header_branch
    %11 = sbr.rel (%p9) target = $region8
  $region5: #{multi_scale_loss.7} parent=0 // loop_body
    %s13 = ssub.s32 %s8, 1
    %s14 = ssub.s32 %s8, 2
    %s21 = sadd.s32 1, %s16
    %p22 = scmp.ge.s32.totalorder %s21, 1
    %s23 = scalar_select %p22, 0, %s21
    %s24 = sadd.s32 1, %s15
    %s25 = scalar_select %p22, %s24, %s15
    %p26 = scmp.ge.s32.totalorder %s25, 2
    %s27 = scalar_select %p26, 0, %s25
    %s28 = ssub.s32 %s15, %s27
    %s29 = ssub.s32 %s16, %s23
    %s30 = sor.u32 %s28, %s29
    %p31 = scmp.eq.s32.totalorder %s30, 0
    %s33 = sadd.s32 %s32, 1
    %s34 = scalar_select %p31, %s32, %s33
    %p37 = pneg %p31
    %p38 = scmp.eq.s32.totalorder %s8, 1
    %p39 = por %p37, %p38
    %p40 = scmp.ne.s32.totalorder %s32, %s35
    %p41 = scmp.eq.s32.totalorder %s8, 0
    %p42 = por %p40, %p41
    %p43 = scmp.ne.s32.totalorder %s32, %s35
    %p44 = scmp.eq.s32.totalorder %s13, 1
    %p45 = por %p43, %p44
    %p46 = scmp.ne.s32.totalorder %s35, %s36
    %p47 = scmp.eq.s32.totalorder %s13, 0
    %p48 = por %p46, %p47
    %p49 = scmp.ne.s32.totalorder %s35, %s36
    %p50 = scmp.eq.s32.totalorder %s14, 1
    %p51 = por %p49, %p50
    %p53 = scmp.ne.s32.totalorder %s36, %s52
    %p54 = scmp.eq.s32.totalorder %s14, 0
    %p55 = por %p53, %p54
    %s56 = ssub.s32 %s15, %s27
    %s57 = ssub.s32 %s16, %s23
    %s58 = sor.u32 %s56, %s57
    %p59 = scmp.eq.s32.totalorder %s58, 0
    %s61 = sadd.s32 %s60, 1
    %s62 = scalar_select %p59, %s60, %s61
    %p65 = pneg %p59
    %p66 = scmp.eq.s32.totalorder %s8, 1
    %p67 = por %p65, %p66
    %p68 = scmp.ne.s32.totalorder %s60, %s63
    %p69 = scmp.eq.s32.totalorder %s8, 0
    %p70 = por %p68, %p69
    %p71 = scmp.ne.s32.totalorder %s60, %s63
    %p72 = scmp.eq.s32.totalorder %s13, 1
    %p73 = por %p71, %p72
    %p74 = scmp.ne.s32.totalorder %s63, %s64
    %p75 = scmp.eq.s32.totalorder %s13, 0
    %p76 = por %p74, %p75
    %p77 = scmp.ne.s32.totalorder %s63, %s64
    %p78 = scmp.eq.s32.totalorder %s14, 1
    %p79 = por %p77, %p78
    %p81 = scmp.ne.s32.totalorder %s64, %s80
    %p82 = scmp.eq.s32.totalorder %s14, 0
    %p83 = por %p81, %p82
    %s84 = ssub.s32 %s15, %s27
    %p85 = scmp.eq.s32.totalorder %s84, 0
    %s87 = sadd.s32 %s86, 1
    %s88 = scalar_select %p85, %s86, %s87
    %p91 = pneg %p85
    %p92 = scmp.eq.s32.totalorder %s8, 1
    %p93 = por %p91, %p92
    %p94 = scmp.ne.s32.totalorder %s86, %s89
    %p95 = scmp.eq.s32.totalorder %s8, 0
    %p96 = por %p94, %p95
    %p97 = scmp.ne.s32.totalorder %s86, %s89
    %p98 = scmp.eq.s32.totalorder %s13, 1
    %p99 = por %p97, %p98
    %p100 = scmp.ne.s32.totalorder %s89, %s90
    %p101 = scmp.eq.s32.totalorder %s13, 0
    %p102 = por %p100, %p101
    %p103 = scmp.ne.s32.totalorder %s89, %s90
    %p104 = scmp.eq.s32.totalorder %s14, 1
    %p105 = por %p103, %p104
    %p107 = scmp.ne.s32.totalorder %s90, %s106
    %p108 = scmp.eq.s32.totalorder %s14, 0
    %p109 = por %p107, %p108
    %p110 = scmp.le.s32.totalorder 1, %s8
    %p111 = scmp.lt.s32.totalorder %s8, 3
    %p112 = pnand %p110, %p111
    %p113 = pneg %p112
    // Predicated region
    $region9: #{multi_scale_loss.7} parent=5 // pred_check
      _
    $region10: #{multi_scale_loss.7} parent=5 // pred_check_branch
      %115 = sbr.rel (%p112) target = $region12
    $region11: #{multi_scale_loss.7} parent=5 // pred_region
      %s116 = ssub.s32 %s8, 1
    $region12: #{multi_scale_loss.7} parent=5 // pred_fallthru
      _
    %p117 = scmp.lt.s32.totalorder %s8, 2
    // Predicated region
    $region13: #{multi_scale_loss.7} parent=5 // pred_check
      %p118 = pneg %p117
    $region14: #{multi_scale_loss.7} parent=5 // pred_check_branch
      %120 = sbr.rel (%p118) target = $region16
    $region15: #{multi_scale_loss.7} parent=5 // pred_region
      // Predicated region
      $region17: #{multi_scale_loss.7} parent=15 // pred_check
        %p121 = pneg %p42
      $region18: #{multi_scale_loss.7} parent=15 // pred_check_branch
        %123 = sbr.rel (%p121) target = $region20
      $region19: #{multi_scale_loss.7} parent=15 // pred_region
        %p124 = scmp.lt.s32.totalorder %s15, 1
        %s125 = scalar_select %p124, %s15, 1
        %p126 = scmp.lt.s32.totalorder %s16, 0
        %s127 = scalar_select %p126, %s16, 0
        %s128 = smul.addr %s125, 4
        %s129 = sadd.s32 %s127, %s128
        %s130 = smul.addr %s129, 8
        %s131 = scalar_lea.vmem %s0, %s130
      $region20: #{multi_scale_loss.7} parent=15 // pred_fallthru
        _
      // Predicated region
      $region21: #{multi_scale_loss.7} parent=15 // pred_check
        %p132 = pneg %p70
      $region22: #{multi_scale_loss.7} parent=15 // pred_check_branch
        %134 = sbr.rel (%p132) target = $region24
      $region23: #{multi_scale_loss.7} parent=15 // pred_region
        %p135 = scmp.lt.s32.totalorder %s15, 1
        %s136 = scalar_select %p135, %s15, 1
        %p137 = scmp.lt.s32.totalorder %s16, 0
        %s138 = scalar_select %p137, %s16, 0
        %s139 = sadd.s32 %s138, %s136
        %s140 = scalar_lea.vmem %s1, %s139
      $region24: #{multi_scale_loss.7} parent=15 // pred_fallthru
        _
    $region16: #{multi_scale_loss.7} parent=5 // pred_fallthru
      _
    %p141 = scmp.le.s32.totalorder 1, %s8
    %p142 = scmp.lt.s32.totalorder %s8, 3
    %p143 = pnand %p141, %p142
    %p144 = pneg %p143
    // Predicated region
    $region25: #{multi_scale_loss.7} parent=5 // pred_check
      _
    $region26: #{multi_scale_loss.7} parent=5 // pred_check_branch
      %146 = sbr.rel (%p143) target = $region28
    $region27: #{multi_scale_loss.7} parent=5 // pred_region
      %s147 = ssub.s32 %s8, 1
      %p148 = scmp.lt.s32.totalorder %s17, 1
      %s149 = scalar_select %p148, %s17, 1
      %p150 = scmp.lt.s32.totalorder %s18, 0
      %s151 = scalar_select %p150, %s18, 0
      %s152 = smul.addr %s149, 4
      %s153 = sadd.s32 %s151, %s152
      %s154 = smul.addr %s153, 8
      %s155 = scalar_lea.vmem %s0, %s154
      %p156 = pneg %p48
      %p157 = pneg %p45
      %p158 = scmp.lt.s32.totalorder %s17, 1
      %s159 = scalar_select %p158, %s17, 1
      %p160 = scmp.lt.s32.totalorder %s18, 0
      %s161 = scalar_select %p160, %s18, 0
      %s162 = sadd.s32 %s161, %s159
      %s163 = scalar_lea.vmem %s1, %s162
      %p164 = pneg %p76
      %p165 = pneg %p73
      %p166 = pneg %p102
      %p167 = pneg %p99
      %p168 = scmp.lt.s32.totalorder %s17, 1
      %s169 = scalar_select %p168, %s17, 1
      %s170 = scalar_lea.vmem %s2, %s169
      %p171 = scmp.lt.s32.totalorder %s17, 1
      %s172 = scalar_select %p171, %s17, 1
      %p173 = scmp.lt.s32.totalorder %s18, 0
      %s174 = scalar_select %p173, %s18, 0
      %s175 = smul.addr %s172, 4
      %s176 = sadd.s32 %s174, %s175
      %s177 = smul.addr %s176, 8
      %s178 = scalar_lea.vmem %s0, %s177
      %p179 = scmp.lt.s32.totalorder %s17, 1
      %s180 = scalar_select %p179, %s17, 1
      %p181 = scmp.lt.s32.totalorder %s18, 0
      %s182 = scalar_select %p181, %s18, 0
      %s183 = sadd.s32 %s182, %s180
      %s184 = scalar_lea.vmem %s1, %s183
      %p185 = scmp.lt.s32.totalorder %s17, 1
      %s186 = scalar_select %p185, %s17, 1
      %s187 = scalar_lea.vmem %s2, %s186
      %p188 = scmp.eq.s32.totalorder %s18, 0
      // Predicated region
      $region29: #{multi_scale_loss.7} parent=27 // pred_check
        %p189 = pneg %p188
      $region30: #{multi_scale_loss.7} parent=27 // pred_check_branch
        %191 = sbr.rel (%p189) target = $region32
      $region31: #{multi_scale_loss.7} parent=27 // pred_region
        %vm192 = vcmask 261120
        %193 = vst.msk [vmem:[#allocation2] sm:$0xff] %vm192, 0.0
        %194 = vst.msk [vmem:[#allocation2 + $0x8] sm:$0xff] %vm192, 0.0
        %195 = vst.msk [vmem:[#allocation2 + $0x10] sm:$0xff] %vm192, 0.0
        %196 = vst.msk [vmem:[#allocation2 + $0x18] sm:$0xff] %vm192, 0.0
        %vm197 = vcmask 0
        %198 = vst.msk [vmem:[#allocation3] sm:$0x1] %vm197, 0.0
      $region32: #{multi_scale_loss.7} parent=27 // pred_fallthru
        _
      %v199 = vld [vmem:[%s178] sm:$0xff]
      %v200 = vld [vmem:[%s178 + $0x8] sm:$0xff]
      %v201 = vld [vmem:[%s178 + $0x10] sm:$0xff]
      %v202 = vld [vmem:[%s178 + $0x18] sm:$0xff]
      %v203 = vld [vmem:[%s184] sm:$0x1]
      %v204 = vld [vmem:[#allocation2] sm:$0xff]
      %v205 = vld [vmem:[#allocation2 + $0x8] sm:$0xff]
      %v206 = vld [vmem:[#allocation2 + $0x10] sm:$0xff]
      %v207 = vld [vmem:[#allocation2 + $0x18] sm:$0xff]
      %vm208 = vcmask 523264
      %v210 = vsel %vm208, %v199, 0
      %v213 = vsel %vm208, %v200, 0
      %v216 = vsel %vm208, %v201, 0
      %v219 = vsel %vm208, %v202, 0
      %221 = vmatprep.subr.mxu0 0.0
      %222 = vmatpush1.xpose.msra.mxu0 %v210
      %223 = vmatprep.subr.mxu0 0.0
      %224 = vmatpush1.xpose.msra.mxu0 %v213
      %225 = vmatprep.subr.mxu0 0.0
      %226 = vmatpush1.xpose.msra.mxu0 %v216
      %227 = vmatprep.subr.mxu0 0.0
      %228 = vmatpush1.xpose.msra.mxu0 %v219
      %229 = vmatprep.subr.mxu0 0.0
      %230 = vmatpush1.xpose.msra.mxu0 0.0
      %231 = vmatprep.subr.mxu0 0.0
      %232 = vmatpush1.xpose.msra.mxu0 0.0
      %233 = vmatprep.subr.mxu0 0.0
      %234 = vmatpush1.xpose.msra.mxu0 0.0
      %235 = vmatprep.subr.mxu0 0.0
      %236 = vmatpush1.xpose.msra.mxu0 0.0
      %237 = vmatprep.subr.mxu0 0.0
      %238 = vmatpush1.xpose.msra.mxu0 0.0
      %239 = vmatprep.subr.mxu0 0.0
      %240 = vmatpush1.xpose.msra.mxu0 0.0
      %241 = vmatprep.subr.mxu0 0.0
      %242 = vmatpush1.xpose.msra.mxu0 0.0
      %243 = vmatprep.subr.mxu0 0.0
      %244 = vmatpush1.xpose.msra.mxu0 0.0
      %245 = vmatprep.subr.mxu0 0.0
      %246 = vmatpush1.xpose.msra.mxu0 0.0
      %247 = vmatprep.subr.mxu0 0.0
      %248 = vmatpush1.xpose.msra.mxu0 0.0
      %249 = vmatprep.subr.mxu0 0.0
      %250 = vmatpush1.xpose.msra.mxu0 0.0
      %251 = vmatprep.subr.mxu0 0.0
      %252 = vmatpush1.xpose.msra.mxu0 0.0
      %253 = vmatprep.subr.mxu0 0.0
      %254 = vmatpush1.xpose.msra.mxu0 0.0
      %255 = vmatprep.subr.mxu0 0.0
      %256 = vmatpush1.xpose.msra.mxu0 0.0
      %257 = vmatprep.subr.mxu0 0.0
      %258 = vmatpush1.xpose.msra.mxu0 0.0
      %259 = vmatprep.subr.mxu0 0.0
      %260 = vmatpush1.xpose.msra.mxu0 0.0
      %261 = vmatprep.subr.mxu0 0.0
      %262 = vmatpush1.xpose.msra.mxu0 0.0
      %263 = vmatprep.subr.mxu0 0.0
      %264 = vmatpush1.xpose.msra.mxu0 0.0
      %265 = vmatprep.subr.mxu0 0.0
      %266 = vmatpush1.xpose.msra.mxu0 0.0
      %267 = vmatprep.subr.mxu0 0.0
      %268 = vmatpush1.xpose.msra.mxu0 0.0
      %269 = vmatprep.subr.mxu0 0.0
      %270 = vmatpush1.xpose.msra.mxu0 0.0
      %271 = vmatprep.subr.mxu0 0.0
      %272 = vmatpush1.xpose.msra.mxu0 0.0
      %273 = vmatprep.subr.mxu0 0.0
      %274 = vmatpush1.xpose.msra.mxu0 0.0
      %275 = vmatprep.subr.mxu0 0.0
      %276 = vmatpush1.xpose.msra.mxu0 0.0
      %277 = vmatprep.subr.mxu0 0.0
      %278 = vmatpush1.xpose.msra.mxu0 0.0
      %279 = vmatprep.subr.mxu0 0.0
      %280 = vmatpush1.xpose.msra.mxu0 0.0
      %281 = vmatprep.subr.mxu0 0.0
      %282 = vmatpush1.xpose.msra.mxu0 0.0
      %283 = vmatprep.subr.mxu0 0.0
      %284 = vmatpush1.xpose.msra.mxu0 0.0
      %285 = vmatprep.mubr.f32.mxu0 0.0
      %286 = vmatmul.mubr.f32.gmra.mrb[0].mxu0 %v210
      %v287 = vpop.f32.mrb[0].mxu0
      %v288 = vadd.f32 0.0, %v287
      %v289 = vpop.f32.mrb[0].mxu0
      %290 = vmatprep.mubr.f32.mxu0 0.0
      %291 = vmatmul.mubr.f32.gmra.mrb[0].mxu0 %v213
      %v292 = vpop.f32.mrb[0].mxu0
      %v293 = vadd.f32 0.0, %v292
      %v294 = vpop.f32.mrb[0].mxu0
      %295 = vmatprep.mubr.f32.mxu0 0.0
      %296 = vmatmul.mubr.f32.gmra.mrb[0].mxu0 %v216
      %v297 = vpop.f32.mrb[0].mxu0
      %v298 = vadd.f32 0.0, %v297
      %v299 = vpop.f32.mrb[0].mxu0
      %300 = vmatprep.mubr.f32.mxu0 0.0
      %301 = vmatmul.mubr.f32.gmra.mrb[0].mxu0 %v219
      %v302 = vpop.f32.mrb[0].mxu0
      %v303 = vadd.f32 0.0, %v302
      %v304 = vpop.f32.mrb[0].mxu0
      %305 = vdwg.mxu0
      %v306 = vadd.f32 %v204, %v288
      %v307 = vadd.f32 %v205, %v293
      %v308 = vadd.f32 %v206, %v298
      %v309 = vadd.f32 %v207, %v303
      %vm310 = vcmask 261120
      %311 = vst.msk [vmem:[#allocation2] sm:$0xff] %vm310, %v306
      %312 = vst.msk [vmem:[#allocation2 + $0x8] sm:$0xff] %vm310, %v307
      %313 = vst.msk [vmem:[#allocation2 + $0x10] sm:$0xff] %vm310, %v308
      %314 = vst.msk [vmem:[#allocation2 + $0x18] sm:$0xff] %vm310, %v309
      %v315 = vld [vmem:[#allocation3] sm:$0x1]
      %v316 = vmul.f32 %v203, %v203
      %vm317 = vcmask 516096
      %v318 = vsel %vm317, %v316, 0.0
      %319 = vadd.xlane.f32.xlu0 %v318
      %v320 = vpop.xlane.xlu0 %319
      %v321 = vrot.slane %v320, 4
      %v322 = vadd.f32 %v320, %v321
      %v323 = vrot.slane %v322, 2
      %v324 = vadd.f32 %v322, %v323
      %v325 = vrot.slane %v324, 1
      %v326 = vadd.f32 %v324, %v325
      %s327 = vtos %v326
      %v328 = vstv %s327
      %v329 = vadd.f32 %v315, %v328
      %vm330 = vcmask 0
      %331 = vst.msk [vmem:[#allocation3] sm:$0x1] %vm330, %v329
      // Predicated region
      $region33: #{multi_scale_loss.7} parent=27 // pred_check
        %p332 = pneg %p188
      $region34: #{multi_scale_loss.7} parent=27 // pred_check_branch
        %334 = sbr.rel (%p332) target = $region36
      $region35: #{multi_scale_loss.7} parent=27 // pred_region
        %v335 = vld [vmem:[#allocation2] sm:$0xff]
        %v336 = vld [vmem:[#allocation2 + $0x8] sm:$0xff]
        %v337 = vld [vmem:[#allocation2 + $0x10] sm:$0xff]
        %v338 = vld [vmem:[#allocation2 + $0x18] sm:$0xff]
        %v339 = vmul.f32 %v335, 0.015625
        %v340 = vmul.f32 %v336, 0.015625
        %v341 = vmul.f32 %v337, 0.015625
        %v342 = vmul.f32 %v338, 0.015625
        %v343 = vld [vmem:[#allocation3] sm:$0x1]
        %v344 = vmul.f32 %v343, 0.015625
        %v346 = vlaneseq
        %v347 = vshrl.u32 %v346, 7
        %v348 = vsub.s32 0, %v347
        %v349 = vrot.slane %v344, %v348
        %350 = vset.pattern.permute.xlu0 0
        %351 = vperm.xlu0 %350, %v349
        %v352 = vpop.permute.xlu0 %351
        %v354 = vsub.f32 %v339, %v352
        %v355 = vsub.f32 %v340, %v352
        %v356 = vsub.f32 %v341, %v352
        %v357 = vsub.f32 %v342, %v352
        %v358 = vmul.f32 %v354, %v354
        %v359 = vmul.f32 %v355, %v355
        %v360 = vmul.f32 %v356, %v356
        %v361 = vmul.f32 %v357, %v357
        %v362 = vsel %vm310, %v358, 0.0
        %v363 = vsel %vm310, %v359, 0.0
        %v364 = vadd.f32 %v362, %v363
        %v365 = vsel %vm310, %v360, 0.0
        %v366 = vadd.f32 %v364, %v365
        %v367 = vsel %vm310, %v361, 0.0
        %v368 = vadd.f32 %v366, %v367
        %369 = vadd.xlane.f32.xlu0 %v368
        %v370 = vpop.xlane.xlu0 %369
        %v371 = vrot.slane %v370, 4
        %v372 = vadd.f32 %v370, %v371
        %v373 = vrot.slane %v372, 2
        %v374 = vadd.f32 %v372, %v373
        %v375 = vrot.slane %v374, 1
        %v376 = vadd.f32 %v374, %v375
        %s377 = vtos %v376
        %v378 = vstv %s377
        %379 = vst.msk [vmem:[%s187] sm:$0x1] %vm330, %v378
      $region36: #{multi_scale_loss.7} parent=27 // pred_fallthru
        _
      %p380 = scmp.lt.s32.totalorder %s17, 1
      %s381 = scalar_select %p380, %s17, 1
      %s382 = scalar_lea.vmem %s2, %s381
      // Predicated region
      $region37: #{multi_scale_loss.7} parent=27 // pred_check
        %p383 = pneg %p99
      $region38: #{multi_scale_loss.7} parent=27 // pred_check_branch
        %385 = sbr.rel (%p383) target = $region40
      $region39: #{multi_scale_loss.7} parent=27 // pred_region
        _
      $region40: #{multi_scale_loss.7} parent=27 // pred_fallthru
        _
    $region28: #{multi_scale_loss.7} parent=5 // pred_fallthru
      _
    %p386 = scmp.le.s32.totalorder 2, %s8
    // Predicated region
    $region41: #{multi_scale_loss.7} parent=5 // pred_check
      %p387 = pneg %p386
    $region42: #{multi_scale_loss.7} parent=5 // pred_check_branch
      %389 = sbr.rel (%p387) target = $region44
    $region43: #{multi_scale_loss.7} parent=5 // pred_region
      %s390 = ssub.s32 %s8, 2
      // Predicated region
      $region45: #{multi_scale_loss.7} parent=43 // pred_check
        %p391 = pneg %p105
      $region46: #{multi_scale_loss.7} parent=43 // pred_check_branch
        %393 = sbr.rel (%p391) target = $region48
      $region47: #{multi_scale_loss.7} parent=43 // pred_region
        %p394 = scmp.lt.s32.totalorder %s19, 1
        %s395 = scalar_select %p394, %s19, 1
        %s396 = scalar_lea.vmem %s2, %s395
      $region48: #{multi_scale_loss.7} parent=43 // pred_fallthru
        _
    $region44: #{multi_scale_loss.7} parent=5 // pred_fallthru
      _
  $region6: #{multi_scale_loss.7} parent=0 // loop_footer
    %s12 = sadd.s32 1, %s8
  $region7: #{multi_scale_loss.7} parent=0 // loop_footer_branch
    %7 = sbr.rel target = $region3
  $region8: #{multi_scale_loss.7} parent=0 // loop_exit
    _

// kernel: multi_scale_loss.4
$region0: #{multi_scale_loss.4}
  #allocation0 [shape = 'u32[]', space=smem, size = 0x4, offset = 0x4, fixed_abs, tag = 'smem constant byte address 0x4 - core index']
  #allocation1 [shape = 'u32[144,128]{1,0:T(1,128)}', space=vmem, size = 0x12000, scoped, tag = 'internal scratch']
  %s0 = inlined_call_operand.vmem [shape: f32[8,1024], index: 0, kind: input, shape index: {}]
  %s1 = inlined_call_operand.vmem [shape: f32[8,1024], index: 1, kind: input, shape index: {}]
  %s2 = inlined_call_operand.hbm [shape: f32[1,1,1], index: 2, kind: output, shape index: {0}]
  %s3 = inlined_call_operand.hbm [shape: f32[1,1,1], index: 3, kind: output, shape index: {1}]
  %4 = xla_tuple %s2, %s3
  %s5 = sld [smem:[#allocation0]]
  $region26: #{multi_scale_loss.4} parent=0
    _
  %s7 = ssub.s32 1, %s5
  %s8 = scalar_select 0, %s7, %s5
  $region1: #{multi_scale_loss.4} parent=0
    #allocation2 [shape = 'u8[512]{0}', space=vmem, size = 0x400, scoped, tag = 'output window, operand 0, single buffered']
    #allocation3 [shape = 's32[1]{0}', space=sflag, size = 0x4, scoped, tag = 'scoped memory for multi_scale_loss.4']
    #allocation4 [shape = 'u8[512]{0}', space=vmem, size = 0x400, scoped, tag = 'output window, operand 1, single buffered']
    #allocation5 [shape = 's32[1]{0}', space=sflag, size = 0x4, scoped, tag = 'scoped memory for multi_scale_loss.4']
    %9 = vsyncpa [#allocation3], 0
    %10 = vsyncpa [#allocation5], 0
    // Predicated region
    $region2: #{multi_scale_loss.4} parent=1 // pred_check
      _
    $region3: #{multi_scale_loss.4} parent=1 // pred_check_branch
      %12 = sbr.rel (0) target = $region5
    $region4: #{multi_scale_loss.4} parent=1 // pred_region
      _
    $region5: #{multi_scale_loss.4} parent=1 // pred_fallthru
      _
    // Predicated region
    $region6: #{multi_scale_loss.4} parent=1 // pred_check
      _
    $region7: #{multi_scale_loss.4} parent=1 // pred_check_branch
      %14 = sbr.rel (0) target = $region9
    $region8: #{multi_scale_loss.4} parent=1 // pred_region
      _
    $region9: #{multi_scale_loss.4} parent=1 // pred_fallthru
      _
    %v15 = vld [vmem:[%s0] sm:$0xff]
    %v16 = vld [vmem:[%s0 + $0x8] sm:$0xff]
    %v17 = vld [vmem:[%s0 + $0x10] sm:$0xff]
    %v18 = vld [vmem:[%s0 + $0x18] sm:$0xff]
    %v19 = vld [vmem:[%s0 + $0x20] sm:$0xff]
    %v20 = vld [vmem:[%s0 + $0x28] sm:$0xff]
    %v21 = vld [vmem:[%s0 + $0x30] sm:$0xff]
    %v22 = vld [vmem:[%s0 + $0x38] sm:$0xff]
    %v23 = vld [vmem:[%s1] sm:$0xff]
    %v24 = vld [vmem:[%s1 + $0x8] sm:$0xff]
    %v25 = vld [vmem:[%s1 + $0x10] sm:$0xff]
    %v26 = vld [vmem:[%s1 + $0x18] sm:$0xff]
    %v27 = vld [vmem:[%s1 + $0x20] sm:$0xff]
    %v28 = vld [vmem:[%s1 + $0x28] sm:$0xff]
    %v29 = vld [vmem:[%s1 + $0x30] sm:$0xff]
    %v30 = vld [vmem:[%s1 + $0x38] sm:$0xff]
    %v31 = vsub.f32 %v15, %v23
    %v32 = vsub.f32 %v16, %v24
    %v33 = vsub.f32 %v17, %v25
    %v34 = vsub.f32 %v18, %v26
    %v35 = vsub.f32 %v19, %v27
    %v36 = vsub.f32 %v20, %v28
    %v37 = vsub.f32 %v21, %v29
    %v38 = vsub.f32 %v22, %v30
    %v39 = vmul.f32 %v31, %v31
    %v40 = vmul.f32 %v32, %v32
    %v41 = vmul.f32 %v33, %v33
    %v42 = vmul.f32 %v34, %v34
    %v43 = vmul.f32 %v35, %v35
    %v44 = vmul.f32 %v36, %v36
    %v45 = vmul.f32 %v37, %v37
    %v46 = vmul.f32 %v38, %v38
    %v47 = vadd.f32 %v39, %v40
    %v48 = vadd.f32 %v47, %v41
    %v49 = vadd.f32 %v48, %v42
    %v50 = vadd.f32 %v49, %v43
    %v51 = vadd.f32 %v50, %v44
    %v52 = vadd.f32 %v51, %v45
    %v53 = vadd.f32 %v52, %v46
    %54 = vadd.xlane.f32.xlu0 %v53
    %v55 = vpop.xlane.xlu0 %54
    %v56 = vrot.slane %v55, 4
    %v57 = vadd.f32 %v55, %v56
    %v58 = vrot.slane %v57, 2
    %v59 = vadd.f32 %v57, %v58
    %v60 = vrot.slane %v59, 1
    %v61 = vadd.f32 %v59, %v60
    %s62 = vtos %v61
    %v63 = vstv %s62
    %vm64 = vcmask 0
    %65 = vst.msk [vmem:[#allocation2] sm:$0x1] %vm64, %v63
    %v66 = vand.u32 2147483647, %v31
    %v67 = vand.u32 2147483647, %v32
    %v68 = vand.u32 2147483647, %v33
    %v69 = vand.u32 2147483647, %v34
    %v70 = vand.u32 2147483647, %v35
    %v71 = vand.u32 2147483647, %v36
    %v72 = vand.u32 2147483647, %v37
    %v73 = vand.u32 2147483647, %v38
    %v74 = vadd.f32 %v66, %v67
    %v75 = vadd.f32 %v74, %v68
    %v76 = vadd.f32 %v75, %v69
    %v77 = vadd.f32 %v76, %v70
    %v78 = vadd.f32 %v77, %v71
    %v79 = vadd.f32 %v78, %v72
    %v80 = vadd.f32 %v79, %v73
    %81 = vadd.xlane.f32.xlu0 %v80
    %v82 = vpop.xlane.xlu0 %81
    %v83 = vrot.slane %v82, 4
    %v84 = vadd.f32 %v82, %v83
    %v85 = vrot.slane %v84, 2
    %v86 = vadd.f32 %v84, %v85
    %v87 = vrot.slane %v86, 1
    %v88 = vadd.f32 %v86, %v87
    %s89 = vtos %v88
    %v90 = vstv %s89
    %91 = vst.msk [vmem:[#allocation4] sm:$0x1] %vm64, %v90
    // Predicated region
    $region10: #{multi_scale_loss.4} parent=1 // pred_check
      _
    $region11: #{multi_scale_loss.4} parent=1 // pred_check_branch
      %93 = sbr.rel (0) target = $region13
    $region12: #{multi_scale_loss.4} parent=1 // pred_region
      %s95 = ssub.s32 16, 16
      %96 = vsyncadd [#allocation3], %s95
      %s98 = sshll.u32 [#allocation2], 4
      %s99 = int_to_ptr.vmem [resolvable:$true] %s98
      %101 = dma.vmem_to_hbm [thread:$0]  %s99, 16, %s2, [#allocation3]
    $region13: #{multi_scale_loss.4} parent=1 // pred_fallthru
      _
    // Predicated region
    $region14: #{multi_scale_loss.4} parent=1 // pred_check
      _
    $region15: #{multi_scale_loss.4} parent=1 // pred_check_branch
      %103 = sbr.rel (0) target = $region17
    $region16: #{multi_scale_loss.4} parent=1 // pred_region
      %s105 = ssub.s32 16, 16
      %106 = vsyncadd [#allocation5], %s105
      %s108 = sshll.u32 [#allocation4], 4
      %s109 = int_to_ptr.vmem [resolvable:$true] %s108
      %111 = dma.vmem_to_hbm [thread:$0]  %s109, 16, %s3, [#allocation5]
    $region17: #{multi_scale_loss.4} parent=1 // pred_fallthru
      _
    // Predicated region
    $region18: #{multi_scale_loss.4} parent=1 // pred_check
      _
    $region19: #{multi_scale_loss.4} parent=1 // pred_check_branch
      %113 = sbr.rel (0) target = $region21
    $region20: #{multi_scale_loss.4} parent=1 // pred_region
      %114 = dma.done [#allocation3], 16
    $region21: #{multi_scale_loss.4} parent=1 // pred_fallthru
      _
    // Predicated region
    $region22: #{multi_scale_loss.4} parent=1 // pred_check
      _
    $region23: #{multi_scale_loss.4} parent=1 // pred_check_branch
      %116 = sbr.rel (0) target = $region25
    $region24: #{multi_scale_loss.4} parent=1 // pred_region
      %117 = dma.done [#allocation5], 16
    $region25: #{multi_scale_loss.4} parent=1 // pred_fallthru
      _
    %118 = vsyncpa [#allocation3], 1
    %119 = vsyncpa [#allocation5], 1

</llo_original>
